<compile_context>
chip_gen: v7x
topology: tpu7x:2x2x1
jax: 0.10.0
libtpu: 0.0.40
codegen_flags: <defaults>
</compile_context>

<pallas_src>
import functools

import jax
import jax.numpy as jnp
from jax.experimental import pallas as pl
from jax.experimental.pallas import tpu as pltpu


def _round_up(n, m):
    return (n + m - 1) // m * m


# Below this many (tap x in-channel) terms per parity, the channel contraction
# stays on the VPU (exact f32); above it, it goes to the MXU.
_VPU_CONTRACT_MAX = 128


def _upsampling_kernel(xf_ref, w_ref, mask_ref, iln_ref, out_ref,
                       *, wp, h, w, cout, eps):
    """Fused sub-pixel 3x3 conv + ILN + ReLU for one image.

    xf_ref:   (1, cin, lin)       flattened edge-padded ORIGINAL-res image,
                                  flat index = row*wp + col, zero tail padding
    w_ref:    (4, cout_p, 4*cin)  folded 2x2 weights per parity, lane = tap*cin+ci
    mask_ref: (1, nq)             1.0 on valid output pixels of the flat layout
    iln_ref:  (4, cout_p, 1)      [rho, gamma, beta, channel-valid mask]
    out_ref:  (1, 4, cout_p, nq)  per-parity conv+ILN+ReLU output (flat layout)
    """
    cin = xf_ref.shape[1]
    cout_p = out_ref.shape[2]
    nq = out_ref.shape[3]

    xf = xf_ref[0]                                  # (cin, lin)
    mask = mask_ref[...]                            # (1, nq)

    # 9 distinct shifted windows (row offset ro, col offset co in {0,1,2});
    # each parity's 2x2 taps are a subset, so the slices are hoisted & reused.
    win = {}
    for ro in range(3):
        for co in range(3):
            s = ro * wp + co
            win[(ro, co)] = xf[:, s:s + nq]         # (cin, nq), static offset

    use_mxu = cin * 4 > _VPU_CONTRACT_MAX

    # --- sub-pixel conv: one (cout_p, nq) accumulator per output parity ------
    accs = []
    for pa in range(2):
        for pb in range(2):
            ph = pa * 2 + pb
            w_ph = w_ref[ph]                        # (cout_p, 4*cin), resident
            if use_mxu:
                # im2col of the 4 static shifts -> one big-K MXU matmul.
                stacked = jnp.concatenate(
                    [win[(pa + rr, pb + ss)] for rr in range(2) for ss in range(2)],
                    axis=0)                         # (4*cin, nq)
                acc = jnp.dot(w_ph, stacked, preferred_element_type=jnp.float32)
            else:
                # Tiny channel count: exact f32 broadcast-FMAs on the VPU,
                # two independent partial accumulators for ILP.
                p0 = jnp.zeros((cout_p, nq), jnp.float32)
                p1 = jnp.zeros((cout_p, nq), jnp.float32)
                idx = 0
                for rr in range(2):
                    for ss in range(2):
                        t = rr * 2 + ss
                        wv = win[(pa + rr, pb + ss)]
                        wt = w_ph[:, t * cin:(t + 1) * cin]      # (cout_p, cin)
                        for ci in range(cin):
                            term = wt[:, ci:ci + 1] * wv[ci:ci + 1, :]
                            if idx & 1:
                                p1 = p1 + term
                            else:
                                p0 = p0 + term
                            idx += 1
                acc = p0 + p1
            accs.append(acc)

    # --- ILN (unbiased, n-1) folded into a single a*x+b epilogue -------------
    n_in = float(4 * h * w)                          # valid pixels per channel
    n_ln = float(cout) * n_in                        # valid pixels per image

    sum_c = jnp.zeros((cout_p, 1), jnp.float32)
    for acc in accs:
        sum_c = sum_c + jnp.sum(acc * mask, axis=-1, keepdims=True)
    mean_c = sum_c * (1.0 / n_in)                    # per-channel (IN) mean

    ss_c = jnp.zeros((cout_p, 1), jnp.float32)       # centered sum of squares
    for acc in accs:
        d = (acc - mean_c) * mask
        ss_c = ss_c + jnp.sum(d * d, axis=-1, keepdims=True)
    var_in = ss_c * (1.0 / (n_in - 1.0))

    # LN stats derived exactly from the IN partials (no extra pass over acc).
    ch_mask = iln_ref[3]                             # (cout_p, 1) valid channels
    mean_ln = jnp.sum(sum_c, axis=0, keepdims=True) * (1.0 / n_ln)   # (1, 1)
    dmu = (mean_c - mean_ln) * ch_mask
    var_ln = (jnp.sum(ss_c, axis=0, keepdims=True)
              + n_in * jnp.sum(dmu * dmu, axis=0, keepdims=True)) \
             * (1.0 / (n_ln - 1.0))                  # (1, 1)

    rho = iln_ref[0]
    gamma = iln_ref[1]
    beta = iln_ref[2]
    inv_in = jax.lax.rsqrt(var_in + eps)
    inv_ln = jax.lax.rsqrt(var_ln + eps)
    scale = rho * inv_in + (1.0 - rho) * inv_ln
    shift = -(rho * mean_c * inv_in + (1.0 - rho) * mean_ln * inv_ln)
    a_coef = gamma * scale                           # (cout_p, 1)
    b_coef = gamma * shift + beta                    # (cout_p, 1)

    # --- single fused apply + ReLU + lane-dense store per parity -------------
    for ph, acc in enumerate(accs):
        out = jnp.maximum(acc * a_coef + b_coef, 0.0)
        out_ref[0, ph, :, :] = out.astype(out_ref.dtype)


def prepare_params(conv_w, rho, gamma, beta):
    """One-time parameter re-layout: fold the 3x3 kernel into four 2x2 kernels.

    Under nearest-x2 + ReflectionPad2d(1), output parity (pa, pb) only ever
    sees a 2x2 window of the edge-padded original image, with folded weights:
      rows: pa=0 -> {w[0], w[1]+w[2]},  pa=1 -> {w[0]+w[1], w[2]}   (cols same).
    The folds are plain f32 adds (exact), done once outside the per-call path.
    """
    cout, cin, kh, kw = conv_w.shape
    assert (kh, kw) == (3, 3)
    wf = jnp.asarray(conv_w, jnp.float32)
    cout_p = max(8, _round_up(cout, 8))              # sublane utilization pad

    taps = {}
    for pa in range(2):
        if pa == 0:
            rows = (wf[:, :, 0, :], wf[:, :, 1, :] + wf[:, :, 2, :])
        else:
            rows = (wf[:, :, 0, :] + wf[:, :, 1, :], wf[:, :, 2, :])
        for rr in range(2):
            t = rows[rr]                              # (cout, cin, 3)
            for pb in range(2):
                if pb == 0:
                    cols = (t[:, :, 0], t[:, :, 1] + t[:, :, 2])
                else:
                    cols = (t[:, :, 0] + t[:, :, 1], t[:, :, 2])
                for ss in range(2):
                    taps[(pa, pb, rr, ss)] = cols[ss]  # (cout, cin)

    w_fold = jnp.stack(
        [jnp.stack([taps[(pa, pb, rr, ss)]
                    for rr in range(2) for ss in range(2)], axis=1)
         for pa in range(2) for pb in range(2)],
        axis=0)                                       # (4, cout, 4, cin)
    w_fold = jnp.pad(w_fold, ((0, 0), (0, cout_p - cout), (0, 0), (0, 0)))
    w_fold = w_fold.reshape(4, cout_p, 4 * cin)       # lane index = tap*cin + ci

    def as_col(p, pad_val):
        v = jnp.asarray(p, jnp.float32).reshape(-1)
        v = jnp.pad(v, (0, cout_p - cout), constant_values=pad_val)
        return v.reshape(cout_p, 1)

    ch_mask = (jnp.arange(cout_p) < cout).astype(jnp.float32).reshape(cout_p, 1)
    iln = jnp.stack([as_col(rho, 0.0), as_col(gamma, 0.0),
                     as_col(beta, 0.0), ch_mask], axis=0)   # (4, cout_p, 1)
    return {"w_fold": w_fold, "iln": iln, "cout": cout, "cin": cin}


def upsampling_forward(x, params, *, mode="nearest", eps=1e-5):
    """Forward pass of UpSampling(dim, state=mode); x is NCHW (B, dim, H, W)."""
    if mode != "nearest":
        raise NotImplementedError("only mode='nearest' is implemented")

    B, C, H, W = x.shape
    w_fold = params["w_fold"]
    cout = params["cout"]
    cout_p = w_fold.shape[1]
    assert params["cin"] == C and w_fold.shape[2] == 4 * C

    hp, wp = H + 2, W + 2                             # edge-padded original res
    nq = _round_up(H * wp, 128)                       # lane-aligned flat width
    lin = _round_up(nq + 2 * wp + 2, 128)             # room for the max shift

    # nearest-x2 + ReflectionPad2d(1) collapse to 1-pixel edge padding of the
    # ORIGINAL image under the sub-pixel decomposition (tiny XLA gather).
    x_pad = jnp.pad(x, ((0, 0), (0, 0), (1, 1), (1, 1)), mode="edge")
    xf = x_pad.reshape(B, C, hp * wp)
    xf = jnp.pad(xf, ((0, 0), (0, 0), (0, lin - hp * wp)))

    # Valid-pixel mask over flat q = a*wp + b (each row carries wp cols, W real).
    q = jnp.arange(nq, dtype=jnp.int32)
    mask = ((q < H * wp) & (q % wp < W)).astype(jnp.float32)[None, :]

    kernel = functools.partial(_upsampling_kernel, wp=wp, h=H, w=W,
                               cout=cout, eps=eps)

    # Per-generation VMEM budget derived from the actual working set
    # (double-buffered in/out blocks + live accumulators + hoisted windows).
    est = (2 * C * lin + 2 * 4 * cout_p * nq + 4 * cout_p * nq + 9 * C * nq) * 4
    vmem_limit = int(min(96 * 2 ** 20, max(32 * 2 ** 20, 2 * est)))

    out_ph = pl.pallas_call(
        kernel,
        out_shape=jax.ShapeDtypeStruct((B, 4, cout_p, nq), x.dtype),
        grid=(B,),
        in_specs=[
            pl.BlockSpec((1, C, lin), lambda b: (b, 0, 0)),        # per-image tile
            pl.BlockSpec((4, cout_p, 4 * C), lambda b: (0, 0, 0)),  # resident weights
            pl.BlockSpec((1, nq), lambda b: (0, 0)),                # resident mask
            pl.BlockSpec((4, cout_p, 1), lambda b: (0, 0, 0)),      # rho/gamma/beta/chmask
        ],
        out_specs=pl.BlockSpec((1, 4, cout_p, nq), lambda b: (b, 0, 0, 0)),
        compiler_params=pltpu.CompilerParams(
            dimension_semantics=("parallel",),   # v7x: 2 TCs split the batch
            vmem_limit_bytes=vmem_limit,
        ),
    )(xf, w_fold, mask, params["iln"])

    # De-phase: (B, 4, cout_p, nq) -> (B, cout, 2H, 2W).  Single XLA
    # slice+transpose of the output (see TODO about moving it in-kernel).
    o = out_ph[:, :, :cout, :H * wp].reshape(B, 2, 2, cout, H, wp)[..., :W]
    o = o.transpose(0, 3, 4, 1, 5, 2).reshape(B, cout, 2 * H, 2 * W)
    return o


def _reference(x, conv_w, rho, gamma, beta, eps=1e-5):
    """Pure-JAX reference of UpSampling forward (nearest mode)."""
    x_up = jnp.repeat(jnp.repeat(x, 2, axis=2), 2, axis=3)
    x_pad = jnp.pad(x_up, ((0, 0), (0, 0), (1, 1), (1, 1)), mode="reflect")
    y = jax.lax.conv_general_dilated(
        x_pad, conv_w, window_strides=(1, 1), padding="VALID",
        dimension_numbers=("NCHW", "OIHW", "NCHW"),
        precision=jax.lax.Precision.HIGHEST)
    in_mean = jnp.mean(y, axis=(2, 3), keepdims=True)
    in_var = jnp.var(y, axis=(2, 3), keepdims=True, ddof=1)
    out_in = (y - in_mean) / jnp.sqrt(in_var + eps)
    ln_mean = jnp.mean(y, axis=(1, 2, 3), keepdims=True)
    ln_var = jnp.var(y, axis=(1, 2, 3), keepdims=True, ddof=1)
    out_ln = (y - ln_mean) / jnp.sqrt(ln_var + eps)
    r = rho.reshape(1, -1, 1, 1)
    g = gamma.reshape(1, -1, 1, 1)
    bt = beta.reshape(1, -1, 1, 1)
    out = r * out_in + (1.0 - r) * out_ln
    out = out * g + bt
    return jnp.maximum(out, 0.0)


if __name__ == "__main__":
    key = jax.random.PRNGKey(0)
    B, dim, H, W = 2, 4, 16, 16                      # UpSampling(dim=4, 'nearest')
    cout = dim // 2

    kx, kw = jax.random.split(key, 2)
    x = jax.random.normal(kx, (B, dim, H, W), dtype=jnp.float32)

    # Conv2d(dim, dim//2, 3, bias=False) style init: U(-1/sqrt(fan_in), +..)
    bound = 1.0 / float(dim * 9) ** 0.5
    conv_w = jax.random.uniform(kw, (cout, dim, 3, 3), jnp.float32, -bound, bound)
    # ILN parameters (rho set off its init value to exercise the IN/LN blend).
    rho = jnp.full((cout,), 0.25, jnp.float32)
    gamma = jnp.ones((cout,), jnp.float32)
    beta = jnp.zeros((cout,), jnp.float32)

    params = prepare_params(conv_w, rho, gamma, beta)
    out = upsampling_forward(x, params)
    out = jax.block_until_ready(out)

    ref = _reference(x, conv_w, rho, gamma, beta)
    assert out.shape == (B, cout, 2 * H, 2 * W), out.shape
    err = float(jnp.max(jnp.abs(out - ref)))
    assert err < 2e-3, f"max abs err {err}"

    print("KERNEL_OK")
</pallas_src>

<mosaic_0001>
module attributes {stable_mosaic.version = 11 : i64} {
  func.func @_upsampling_kernel(%arg0: i32, %arg1: memref<1x4x512xf32, #tpu.memory_space<vmem>>, %arg2: memref<4x8x16xf32, #tpu.memory_space<vmem>>, %arg3: memref<1x384xf32, #tpu.memory_space<vmem>>, %arg4: memref<4x8x1xf32, #tpu.memory_space<vmem>>, %arg5: memref<1x4x8x384xf32, #tpu.memory_space<vmem>>) attributes {dimension_semantics = [#tpu.dimension_semantics<parallel>], iteration_bounds = array<i64: 2>, scalar_prefetch = 0 : i64, scratch_operands = 0 : i64, tpu.core_type = #tpu.core_type<tc>, window_params = [{transform_indices = @transform_0, window_bounds = array<i64: 1, 4, 512>}, {pipeline_mode = #tpu.pipeline_mode<synchronous>, transform_indices = @transform_1, window_bounds = array<i64: 4, 8, 16>}, {pipeline_mode = #tpu.pipeline_mode<synchronous>, transform_indices = @transform_2, window_bounds = array<i64: 1, 384>}, {pipeline_mode = #tpu.pipeline_mode<synchronous>, transform_indices = @transform_3, window_bounds = array<i64: 4, 8, 1>}, {transform_indices = @transform_4, window_bounds = array<i64: 1, 4, 8, 384>}]} {
    %c0 = arith.constant 0 : index
    %c0_0 = arith.constant 0 : index
    %c0_1 = arith.constant 0 : index
    %0 = vector.load %arg1[%c0, %c0_0, %c0_1] : memref<1x4x512xf32, #tpu.memory_space<vmem>>, vector<1x4x512xf32>
    %1 = vector.shape_cast %0 : vector<1x4x512xf32> to vector<4x512xf32>
    %c0_2 = arith.constant 0 : index
    %c0_3 = arith.constant 0 : index
    %2 = vector.load %arg3[%c0_2, %c0_3] : memref<1x384xf32, #tpu.memory_space<vmem>>, vector<1x384xf32>
    %3 = vector.extract_strided_slice %1 {offsets = [0, 0], sizes = [4, 384], strides = [1, 1]} : vector<4x512xf32> to vector<4x384xf32>
    %4 = vector.extract_strided_slice %1 {offsets = [0, 1], sizes = [4, 384], strides = [1, 1]} : vector<4x512xf32> to vector<4x384xf32>
    %5 = vector.extract_strided_slice %1 {offsets = [0, 2], sizes = [4, 384], strides = [1, 1]} : vector<4x512xf32> to vector<4x384xf32>
    %6 = vector.extract_strided_slice %1 {offsets = [0, 18], sizes = [4, 384], strides = [1, 1]} : vector<4x512xf32> to vector<4x384xf32>
    %7 = vector.extract_strided_slice %1 {offsets = [0, 19], sizes = [4, 384], strides = [1, 1]} : vector<4x512xf32> to vector<4x384xf32>
    %8 = vector.extract_strided_slice %1 {offsets = [0, 20], sizes = [4, 384], strides = [1, 1]} : vector<4x512xf32> to vector<4x384xf32>
    %9 = vector.extract_strided_slice %1 {offsets = [0, 36], sizes = [4, 384], strides = [1, 1]} : vector<4x512xf32> to vector<4x384xf32>
    %10 = vector.extract_strided_slice %1 {offsets = [0, 37], sizes = [4, 384], strides = [1, 1]} : vector<4x512xf32> to vector<4x384xf32>
    %11 = vector.extract_strided_slice %1 {offsets = [0, 38], sizes = [4, 384], strides = [1, 1]} : vector<4x512xf32> to vector<4x384xf32>
    %c0_4 = arith.constant 0 : index
    %c0_5 = arith.constant 0 : index
    %c0_6 = arith.constant 0 : index
    %12 = vector.load %arg2[%c0_4, %c0_5, %c0_6] : memref<4x8x16xf32, #tpu.memory_space<vmem>>, vector<1x8x16xf32>
    %13 = vector.shape_cast %12 : vector<1x8x16xf32> to vector<8x16xf32>
    %cst = arith.constant 0.000000e+00 : f32
    %14 = vector.broadcast %cst : f32 to vector<8x384xf32>
    %cst_7 = arith.constant 0.000000e+00 : f32
    %15 = vector.broadcast %cst_7 : f32 to vector<8x384xf32>
    %16 = vector.extract_strided_slice %13 {offsets = [0, 0], sizes = [8, 4], strides = [1, 1]} : vector<8x16xf32> to vector<8x4xf32>
    %17 = vector.extract_strided_slice %16 {offsets = [0, 0], sizes = [8, 1], strides = [1, 1]} : vector<8x4xf32> to vector<8x1xf32>
    %18 = vector.extract_strided_slice %3 {offsets = [0, 0], sizes = [1, 384], strides = [1, 1]} : vector<4x384xf32> to vector<1x384xf32>
    %19 = vector.broadcast %17 : vector<8x1xf32> to vector<8x384xf32>
    %20 = vector.broadcast %18 : vector<1x384xf32> to vector<8x384xf32>
    %21 = arith.mulf %19, %20 : vector<8x384xf32>
    %22 = arith.addf %14, %21 : vector<8x384xf32>
    %23 = vector.extract_strided_slice %16 {offsets = [0, 1], sizes = [8, 1], strides = [1, 1]} : vector<8x4xf32> to vector<8x1xf32>
    %24 = vector.extract_strided_slice %3 {offsets = [1, 0], sizes = [1, 384], strides = [1, 1]} : vector<4x384xf32> to vector<1x384xf32>
    %25 = vector.broadcast %23 : vector<8x1xf32> to vector<8x384xf32>
    %26 = vector.broadcast %24 : vector<1x384xf32> to vector<8x384xf32>
    %27 = arith.mulf %25, %26 : vector<8x384xf32>
    %28 = arith.addf %15, %27 : vector<8x384xf32>
    %29 = vector.extract_strided_slice %16 {offsets = [0, 2], sizes = [8, 1], strides = [1, 1]} : vector<8x4xf32> to vector<8x1xf32>
    %30 = vector.extract_strided_slice %3 {offsets = [2, 0], sizes = [1, 384], strides = [1, 1]} : vector<4x384xf32> to vector<1x384xf32>
    %31 = vector.broadcast %29 : vector<8x1xf32> to vector<8x384xf32>
    %32 = vector.broadcast %30 : vector<1x384xf32> to vector<8x384xf32>
    %33 = arith.mulf %31, %32 : vector<8x384xf32>
    %34 = arith.addf %22, %33 : vector<8x384xf32>
    %35 = vector.extract_strided_slice %16 {offsets = [0, 3], sizes = [8, 1], strides = [1, 1]} : vector<8x4xf32> to vector<8x1xf32>
    %36 = vector.extract_strided_slice %3 {offsets = [3, 0], sizes = [1, 384], strides = [1, 1]} : vector<4x384xf32> to vector<1x384xf32>
    %37 = vector.broadcast %35 : vector<8x1xf32> to vector<8x384xf32>
    %38 = vector.broadcast %36 : vector<1x384xf32> to vector<8x384xf32>
    %39 = arith.mulf %37, %38 : vector<8x384xf32>
    %40 = arith.addf %28, %39 : vector<8x384xf32>
    %41 = vector.extract_strided_slice %13 {offsets = [0, 4], sizes = [8, 4], strides = [1, 1]} : vector<8x16xf32> to vector<8x4xf32>
    %42 = vector.extract_strided_slice %41 {offsets = [0, 0], sizes = [8, 1], strides = [1, 1]} : vector<8x4xf32> to vector<8x1xf32>
    %43 = vector.extract_strided_slice %4 {offsets = [0, 0], sizes = [1, 384], strides = [1, 1]} : vector<4x384xf32> to vector<1x384xf32>
    %44 = vector.broadcast %42 : vector<8x1xf32> to vector<8x384xf32>
    %45 = vector.broadcast %43 : vector<1x384xf32> to vector<8x384xf32>
    %46 = arith.mulf %44, %45 : vector<8x384xf32>
    %47 = arith.addf %34, %46 : vector<8x384xf32>
    %48 = vector.extract_strided_slice %41 {offsets = [0, 1], sizes = [8, 1], strides = [1, 1]} : vector<8x4xf32> to vector<8x1xf32>
    %49 = vector.extract_strided_slice %4 {offsets = [1, 0], sizes = [1, 384], strides = [1, 1]} : vector<4x384xf32> to vector<1x384xf32>
    %50 = vector.broadcast %48 : vector<8x1xf32> to vector<8x384xf32>
    %51 = vector.broadcast %49 : vector<1x384xf32> to vector<8x384xf32>
    %52 = arith.mulf %50, %51 : vector<8x384xf32>
    %53 = arith.addf %40, %52 : vector<8x384xf32>
    %54 = vector.extract_strided_slice %41 {offsets = [0, 2], sizes = [8, 1], strides = [1, 1]} : vector<8x4xf32> to vector<8x1xf32>
    %55 = vector.extract_strided_slice %4 {offsets = [2, 0], sizes = [1, 384], strides = [1, 1]} : vector<4x384xf32> to vector<1x384xf32>
    %56 = vector.broadcast %54 : vector<8x1xf32> to vector<8x384xf32>
    %57 = vector.broadcast %55 : vector<1x384xf32> to vector<8x384xf32>
    %58 = arith.mulf %56, %57 : vector<8x384xf32>
    %59 = arith.addf %47, %58 : vector<8x384xf32>
    %60 = vector.extract_strided_slice %41 {offsets = [0, 3], sizes = [8, 1], strides = [1, 1]} : vector<8x4xf32> to vector<8x1xf32>
    %61 = vector.extract_strided_slice %4 {offsets = [3, 0], sizes = [1, 384], strides = [1, 1]} : vector<4x384xf32> to vector<1x384xf32>
    %62 = vector.broadcast %60 : vector<8x1xf32> to vector<8x384xf32>
    %63 = vector.broadcast %61 : vector<1x384xf32> to vector<8x384xf32>
    %64 = arith.mulf %62, %63 : vector<8x384xf32>
    %65 = arith.addf %53, %64 : vector<8x384xf32>
    %66 = vector.extract_strided_slice %13 {offsets = [0, 8], sizes = [8, 4], strides = [1, 1]} : vector<8x16xf32> to vector<8x4xf32>
    %67 = vector.extract_strided_slice %66 {offsets = [0, 0], sizes = [8, 1], strides = [1, 1]} : vector<8x4xf32> to vector<8x1xf32>
    %68 = vector.extract_strided_slice %6 {offsets = [0, 0], sizes = [1, 384], strides = [1, 1]} : vector<4x384xf32> to vector<1x384xf32>
    %69 = vector.broadcast %67 : vector<8x1xf32> to vector<8x384xf32>
    %70 = vector.broadcast %68 : vector<1x384xf32> to vector<8x384xf32>
    %71 = arith.mulf %69, %70 : vector<8x384xf32>
    %72 = arith.addf %59, %71 : vector<8x384xf32>
    %73 = vector.extract_strided_slice %66 {offsets = [0, 1], sizes = [8, 1], strides = [1, 1]} : vector<8x4xf32> to vector<8x1xf32>
    %74 = vector.extract_strided_slice %6 {offsets = [1, 0], sizes = [1, 384], strides = [1, 1]} : vector<4x384xf32> to vector<1x384xf32>
    %75 = vector.broadcast %73 : vector<8x1xf32> to vector<8x384xf32>
    %76 = vector.broadcast %74 : vector<1x384xf32> to vector<8x384xf32>
    %77 = arith.mulf %75, %76 : vector<8x384xf32>
    %78 = arith.addf %65, %77 : vector<8x384xf32>
    %79 = vector.extract_strided_slice %66 {offsets = [0, 2], sizes = [8, 1], strides = [1, 1]} : vector<8x4xf32> to vector<8x1xf32>
    %80 = vector.extract_strided_slice %6 {offsets = [2, 0], sizes = [1, 384], strides = [1, 1]} : vector<4x384xf32> to vector<1x384xf32>
    %81 = vector.broadcast %79 : vector<8x1xf32> to vector<8x384xf32>
    %82 = vector.broadcast %80 : vector<1x384xf32> to vector<8x384xf32>
    %83 = arith.mulf %81, %82 : vector<8x384xf32>
    %84 = arith.addf %72, %83 : vector<8x384xf32>
    %85 = vector.extract_strided_slice %66 {offsets = [0, 3], sizes = [8, 1], strides = [1, 1]} : vector<8x4xf32> to vector<8x1xf32>
    %86 = vector.extract_strided_slice %6 {offsets = [3, 0], sizes = [1, 384], strides = [1, 1]} : vector<4x384xf32> to vector<1x384xf32>
    %87 = vector.broadcast %85 : vector<8x1xf32> to vector<8x384xf32>
    %88 = vector.broadcast %86 : vector<1x384xf32> to vector<8x384xf32>
    %89 = arith.mulf %87, %88 : vector<8x384xf32>
    %90 = arith.addf %78, %89 : vector<8x384xf32>
    %91 = vector.extract_strided_slice %13 {offsets = [0, 12], sizes = [8, 4], strides = [1, 1]} : vector<8x16xf32> to vector<8x4xf32>
    %92 = vector.extract_strided_slice %91 {offsets = [0, 0], sizes = [8, 1], strides = [1, 1]} : vector<8x4xf32> to vector<8x1xf32>
    %93 = vector.extract_strided_slice %7 {offsets = [0, 0], sizes = [1, 384], strides = [1, 1]} : vector<4x384xf32> to vector<1x384xf32>
    %94 = vector.broadcast %92 : vector<8x1xf32> to vector<8x384xf32>
    %95 = vector.broadcast %93 : vector<1x384xf32> to vector<8x384xf32>
    %96 = arith.mulf %94, %95 : vector<8x384xf32>
    %97 = arith.addf %84, %96 : vector<8x384xf32>
    %98 = vector.extract_strided_slice %91 {offsets = [0, 1], sizes = [8, 1], strides = [1, 1]} : vector<8x4xf32> to vector<8x1xf32>
    %99 = vector.extract_strided_slice %7 {offsets = [1, 0], sizes = [1, 384], strides = [1, 1]} : vector<4x384xf32> to vector<1x384xf32>
    %100 = vector.broadcast %98 : vector<8x1xf32> to vector<8x384xf32>
    %101 = vector.broadcast %99 : vector<1x384xf32> to vector<8x384xf32>
    %102 = arith.mulf %100, %101 : vector<8x384xf32>
    %103 = arith.addf %90, %102 : vector<8x384xf32>
    %104 = vector.extract_strided_slice %91 {offsets = [0, 2], sizes = [8, 1], strides = [1, 1]} : vector<8x4xf32> to vector<8x1xf32>
    %105 = vector.extract_strided_slice %7 {offsets = [2, 0], sizes = [1, 384], strides = [1, 1]} : vector<4x384xf32> to vector<1x384xf32>
    %106 = vector.broadcast %104 : vector<8x1xf32> to vector<8x384xf32>
    %107 = vector.broadcast %105 : vector<1x384xf32> to vector<8x384xf32>
    %108 = arith.mulf %106, %107 : vector<8x384xf32>
    %109 = arith.addf %97, %108 : vector<8x384xf32>
    %110 = vector.extract_strided_slice %91 {offsets = [0, 3], sizes = [8, 1], strides = [1, 1]} : vector<8x4xf32> to vector<8x1xf32>
    %111 = vector.extract_strided_slice %7 {offsets = [3, 0], sizes = [1, 384], strides = [1, 1]} : vector<4x384xf32> to vector<1x384xf32>
    %112 = vector.broadcast %110 : vector<8x1xf32> to vector<8x384xf32>
    %113 = vector.broadcast %111 : vector<1x384xf32> to vector<8x384xf32>
    %114 = arith.mulf %112, %113 : vector<8x384xf32>
    %115 = arith.addf %103, %114 : vector<8x384xf32>
    %116 = arith.addf %109, %115 : vector<8x384xf32>
    %c1 = arith.constant 1 : index
    %c0_8 = arith.constant 0 : index
    %c0_9 = arith.constant 0 : index
    %117 = vector.load %arg2[%c1, %c0_8, %c0_9] : memref<4x8x16xf32, #tpu.memory_space<vmem>>, vector<1x8x16xf32>
    %118 = vector.shape_cast %117 : vector<1x8x16xf32> to vector<8x16xf32>
    %cst_10 = arith.constant 0.000000e+00 : f32
    %119 = vector.broadcast %cst_10 : f32 to vector<8x384xf32>
    %cst_11 = arith.constant 0.000000e+00 : f32
    %120 = vector.broadcast %cst_11 : f32 to vector<8x384xf32>
    %121 = vector.extract_strided_slice %118 {offsets = [0, 0], sizes = [8, 4], strides = [1, 1]} : vector<8x16xf32> to vector<8x4xf32>
    %122 = vector.extract_strided_slice %121 {offsets = [0, 0], sizes = [8, 1], strides = [1, 1]} : vector<8x4xf32> to vector<8x1xf32>
    %123 = vector.extract_strided_slice %4 {offsets = [0, 0], sizes = [1, 384], strides = [1, 1]} : vector<4x384xf32> to vector<1x384xf32>
    %124 = vector.broadcast %122 : vector<8x1xf32> to vector<8x384xf32>
    %125 = vector.broadcast %123 : vector<1x384xf32> to vector<8x384xf32>
    %126 = arith.mulf %124, %125 : vector<8x384xf32>
    %127 = arith.addf %119, %126 : vector<8x384xf32>
    %128 = vector.extract_strided_slice %121 {offsets = [0, 1], sizes = [8, 1], strides = [1, 1]} : vector<8x4xf32> to vector<8x1xf32>
    %129 = vector.extract_strided_slice %4 {offsets = [1, 0], sizes = [1, 384], strides = [1, 1]} : vector<4x384xf32> to vector<1x384xf32>
    %130 = vector.broadcast %128 : vector<8x1xf32> to vector<8x384xf32>
    %131 = vector.broadcast %129 : vector<1x384xf32> to vector<8x384xf32>
    %132 = arith.mulf %130, %131 : vector<8x384xf32>
    %133 = arith.addf %120, %132 : vector<8x384xf32>
    %134 = vector.extract_strided_slice %121 {offsets = [0, 2], sizes = [8, 1], strides = [1, 1]} : vector<8x4xf32> to vector<8x1xf32>
    %135 = vector.extract_strided_slice %4 {offsets = [2, 0], sizes = [1, 384], strides = [1, 1]} : vector<4x384xf32> to vector<1x384xf32>
    %136 = vector.broadcast %134 : vector<8x1xf32> to vector<8x384xf32>
    %137 = vector.broadcast %135 : vector<1x384xf32> to vector<8x384xf32>
    %138 = arith.mulf %136, %137 : vector<8x384xf32>
    %139 = arith.addf %127, %138 : vector<8x384xf32>
    %140 = vector.extract_strided_slice %121 {offsets = [0, 3], sizes = [8, 1], strides = [1, 1]} : vector<8x4xf32> to vector<8x1xf32>
    %141 = vector.extract_strided_slice %4 {offsets = [3, 0], sizes = [1, 384], strides = [1, 1]} : vector<4x384xf32> to vector<1x384xf32>
    %142 = vector.broadcast %140 : vector<8x1xf32> to vector<8x384xf32>
    %143 = vector.broadcast %141 : vector<1x384xf32> to vector<8x384xf32>
    %144 = arith.mulf %142, %143 : vector<8x384xf32>
    %145 = arith.addf %133, %144 : vector<8x384xf32>
    %146 = vector.extract_strided_slice %118 {offsets = [0, 4], sizes = [8, 4], strides = [1, 1]} : vector<8x16xf32> to vector<8x4xf32>
    %147 = vector.extract_strided_slice %146 {offsets = [0, 0], sizes = [8, 1], strides = [1, 1]} : vector<8x4xf32> to vector<8x1xf32>
    %148 = vector.extract_strided_slice %5 {offsets = [0, 0], sizes = [1, 384], strides = [1, 1]} : vector<4x384xf32> to vector<1x384xf32>
    %149 = vector.broadcast %147 : vector<8x1xf32> to vector<8x384xf32>
    %150 = vector.broadcast %148 : vector<1x384xf32> to vector<8x384xf32>
    %151 = arith.mulf %149, %150 : vector<8x384xf32>
    %152 = arith.addf %139, %151 : vector<8x384xf32>
    %153 = vector.extract_strided_slice %146 {offsets = [0, 1], sizes = [8, 1], strides = [1, 1]} : vector<8x4xf32> to vector<8x1xf32>
    %154 = vector.extract_strided_slice %5 {offsets = [1, 0], sizes = [1, 384], strides = [1, 1]} : vector<4x384xf32> to vector<1x384xf32>
    %155 = vector.broadcast %153 : vector<8x1xf32> to vector<8x384xf32>
    %156 = vector.broadcast %154 : vector<1x384xf32> to vector<8x384xf32>
    %157 = arith.mulf %155, %156 : vector<8x384xf32>
    %158 = arith.addf %145, %157 : vector<8x384xf32>
    %159 = vector.extract_strided_slice %146 {offsets = [0, 2], sizes = [8, 1], strides = [1, 1]} : vector<8x4xf32> to vector<8x1xf32>
    %160 = vector.extract_strided_slice %5 {offsets = [2, 0], sizes = [1, 384], strides = [1, 1]} : vector<4x384xf32> to vector<1x384xf32>
    %161 = vector.broadcast %159 : vector<8x1xf32> to vector<8x384xf32>
    %162 = vector.broadcast %160 : vector<1x384xf32> to vector<8x384xf32>
    %163 = arith.mulf %161, %162 : vector<8x384xf32>
    %164 = arith.addf %152, %163 : vector<8x384xf32>
    %165 = vector.extract_strided_slice %146 {offsets = [0, 3], sizes = [8, 1], strides = [1, 1]} : vector<8x4xf32> to vector<8x1xf32>
    %166 = vector.extract_strided_slice %5 {offsets = [3, 0], sizes = [1, 384], strides = [1, 1]} : vector<4x384xf32> to vector<1x384xf32>
    %167 = vector.broadcast %165 : vector<8x1xf32> to vector<8x384xf32>
    %168 = vector.broadcast %166 : vector<1x384xf32> to vector<8x384xf32>
    %169 = arith.mulf %167, %168 : vector<8x384xf32>
    %170 = arith.addf %158, %169 : vector<8x384xf32>
    %171 = vector.extract_strided_slice %118 {offsets = [0, 8], sizes = [8, 4], strides = [1, 1]} : vector<8x16xf32> to vector<8x4xf32>
    %172 = vector.extract_strided_slice %171 {offsets = [0, 0], sizes = [8, 1], strides = [1, 1]} : vector<8x4xf32> to vector<8x1xf32>
    %173 = vector.extract_strided_slice %7 {offsets = [0, 0], sizes = [1, 384], strides = [1, 1]} : vector<4x384xf32> to vector<1x384xf32>
    %174 = vector.broadcast %172 : vector<8x1xf32> to vector<8x384xf32>
    %175 = vector.broadcast %173 : vector<1x384xf32> to vector<8x384xf32>
    %176 = arith.mulf %174, %175 : vector<8x384xf32>
    %177 = arith.addf %164, %176 : vector<8x384xf32>
    %178 = vector.extract_strided_slice %171 {offsets = [0, 1], sizes = [8, 1], strides = [1, 1]} : vector<8x4xf32> to vector<8x1xf32>
    %179 = vector.extract_strided_slice %7 {offsets = [1, 0], sizes = [1, 384], strides = [1, 1]} : vector<4x384xf32> to vector<1x384xf32>
    %180 = vector.broadcast %178 : vector<8x1xf32> to vector<8x384xf32>
    %181 = vector.broadcast %179 : vector<1x384xf32> to vector<8x384xf32>
    %182 = arith.mulf %180, %181 : vector<8x384xf32>
    %183 = arith.addf %170, %182 : vector<8x384xf32>
    %184 = vector.extract_strided_slice %171 {offsets = [0, 2], sizes = [8, 1], strides = [1, 1]} : vector<8x4xf32> to vector<8x1xf32>
    %185 = vector.extract_strided_slice %7 {offsets = [2, 0], sizes = [1, 384], strides = [1, 1]} : vector<4x384xf32> to vector<1x384xf32>
    %186 = vector.broadcast %184 : vector<8x1xf32> to vector<8x384xf32>
    %187 = vector.broadcast %185 : vector<1x384xf32> to vector<8x384xf32>
    %188 = arith.mulf %186, %187 : vector<8x384xf32>
    %189 = arith.addf %177, %188 : vector<8x384xf32>
    %190 = vector.extract_strided_slice %171 {offsets = [0, 3], sizes = [8, 1], strides = [1, 1]} : vector<8x4xf32> to vector<8x1xf32>
    %191 = vector.extract_strided_slice %7 {offsets = [3, 0], sizes = [1, 384], strides = [1, 1]} : vector<4x384xf32> to vector<1x384xf32>
    %192 = vector.broadcast %190 : vector<8x1xf32> to vector<8x384xf32>
    %193 = vector.broadcast %191 : vector<1x384xf32> to vector<8x384xf32>
    %194 = arith.mulf %192, %193 : vector<8x384xf32>
    %195 = arith.addf %183, %194 : vector<8x384xf32>
    %196 = vector.extract_strided_slice %118 {offsets = [0, 12], sizes = [8, 4], strides = [1, 1]} : vector<8x16xf32> to vector<8x4xf32>
    %197 = vector.extract_strided_slice %196 {offsets = [0, 0], sizes = [8, 1], strides = [1, 1]} : vector<8x4xf32> to vector<8x1xf32>
    %198 = vector.extract_strided_slice %8 {offsets = [0, 0], sizes = [1, 384], strides = [1, 1]} : vector<4x384xf32> to vector<1x384xf32>
    %199 = vector.broadcast %197 : vector<8x1xf32> to vector<8x384xf32>
    %200 = vector.broadcast %198 : vector<1x384xf32> to vector<8x384xf32>
    %201 = arith.mulf %199, %200 : vector<8x384xf32>
    %202 = arith.addf %189, %201 : vector<8x384xf32>
    %203 = vector.extract_strided_slice %196 {offsets = [0, 1], sizes = [8, 1], strides = [1, 1]} : vector<8x4xf32> to vector<8x1xf32>
    %204 = vector.extract_strided_slice %8 {offsets = [1, 0], sizes = [1, 384], strides = [1, 1]} : vector<4x384xf32> to vector<1x384xf32>
    %205 = vector.broadcast %203 : vector<8x1xf32> to vector<8x384xf32>
    %206 = vector.broadcast %204 : vector<1x384xf32> to vector<8x384xf32>
    %207 = arith.mulf %205, %206 : vector<8x384xf32>
    %208 = arith.addf %195, %207 : vector<8x384xf32>
    %209 = vector.extract_strided_slice %196 {offsets = [0, 2], sizes = [8, 1], strides = [1, 1]} : vector<8x4xf32> to vector<8x1xf32>
    %210 = vector.extract_strided_slice %8 {offsets = [2, 0], sizes = [1, 384], strides = [1, 1]} : vector<4x384xf32> to vector<1x384xf32>
    %211 = vector.broadcast %209 : vector<8x1xf32> to vector<8x384xf32>
    %212 = vector.broadcast %210 : vector<1x384xf32> to vector<8x384xf32>
    %213 = arith.mulf %211, %212 : vector<8x384xf32>
    %214 = arith.addf %202, %213 : vector<8x384xf32>
    %215 = vector.extract_strided_slice %196 {offsets = [0, 3], sizes = [8, 1], strides = [1, 1]} : vector<8x4xf32> to vector<8x1xf32>
    %216 = vector.extract_strided_slice %8 {offsets = [3, 0], sizes = [1, 384], strides = [1, 1]} : vector<4x384xf32> to vector<1x384xf32>
    %217 = vector.broadcast %215 : vector<8x1xf32> to vector<8x384xf32>
    %218 = vector.broadcast %216 : vector<1x384xf32> to vector<8x384xf32>
    %219 = arith.mulf %217, %218 : vector<8x384xf32>
    %220 = arith.addf %208, %219 : vector<8x384xf32>
    %221 = arith.addf %214, %220 : vector<8x384xf32>
    %c2 = arith.constant 2 : index
    %c0_12 = arith.constant 0 : index
    %c0_13 = arith.constant 0 : index
    %222 = vector.load %arg2[%c2, %c0_12, %c0_13] : memref<4x8x16xf32, #tpu.memory_space<vmem>>, vector<1x8x16xf32>
    %223 = vector.shape_cast %222 : vector<1x8x16xf32> to vector<8x16xf32>
    %cst_14 = arith.constant 0.000000e+00 : f32
    %224 = vector.broadcast %cst_14 : f32 to vector<8x384xf32>
    %cst_15 = arith.constant 0.000000e+00 : f32
    %225 = vector.broadcast %cst_15 : f32 to vector<8x384xf32>
    %226 = vector.extract_strided_slice %223 {offsets = [0, 0], sizes = [8, 4], strides = [1, 1]} : vector<8x16xf32> to vector<8x4xf32>
    %227 = vector.extract_strided_slice %226 {offsets = [0, 0], sizes = [8, 1], strides = [1, 1]} : vector<8x4xf32> to vector<8x1xf32>
    %228 = vector.extract_strided_slice %6 {offsets = [0, 0], sizes = [1, 384], strides = [1, 1]} : vector<4x384xf32> to vector<1x384xf32>
    %229 = vector.broadcast %227 : vector<8x1xf32> to vector<8x384xf32>
    %230 = vector.broadcast %228 : vector<1x384xf32> to vector<8x384xf32>
    %231 = arith.mulf %229, %230 : vector<8x384xf32>
    %232 = arith.addf %224, %231 : vector<8x384xf32>
    %233 = vector.extract_strided_slice %226 {offsets = [0, 1], sizes = [8, 1], strides = [1, 1]} : vector<8x4xf32> to vector<8x1xf32>
    %234 = vector.extract_strided_slice %6 {offsets = [1, 0], sizes = [1, 384], strides = [1, 1]} : vector<4x384xf32> to vector<1x384xf32>
    %235 = vector.broadcast %233 : vector<8x1xf32> to vector<8x384xf32>
    %236 = vector.broadcast %234 : vector<1x384xf32> to vector<8x384xf32>
    %237 = arith.mulf %235, %236 : vector<8x384xf32>
    %238 = arith.addf %225, %237 : vector<8x384xf32>
    %239 = vector.extract_strided_slice %226 {offsets = [0, 2], sizes = [8, 1], strides = [1, 1]} : vector<8x4xf32> to vector<8x1xf32>
    %240 = vector.extract_strided_slice %6 {offsets = [2, 0], sizes = [1, 384], strides = [1, 1]} : vector<4x384xf32> to vector<1x384xf32>
    %241 = vector.broadcast %239 : vector<8x1xf32> to vector<8x384xf32>
    %242 = vector.broadcast %240 : vector<1x384xf32> to vector<8x384xf32>
    %243 = arith.mulf %241, %242 : vector<8x384xf32>
    %244 = arith.addf %232, %243 : vector<8x384xf32>
    %245 = vector.extract_strided_slice %226 {offsets = [0, 3], sizes = [8, 1], strides = [1, 1]} : vector<8x4xf32> to vector<8x1xf32>
    %246 = vector.extract_strided_slice %6 {offsets = [3, 0], sizes = [1, 384], strides = [1, 1]} : vector<4x384xf32> to vector<1x384xf32>
    %247 = vector.broadcast %245 : vector<8x1xf32> to vector<8x384xf32>
    %248 = vector.broadcast %246 : vector<1x384xf32> to vector<8x384xf32>
    %249 = arith.mulf %247, %248 : vector<8x384xf32>
    %250 = arith.addf %238, %249 : vector<8x384xf32>
    %251 = vector.extract_strided_slice %223 {offsets = [0, 4], sizes = [8, 4], strides = [1, 1]} : vector<8x16xf32> to vector<8x4xf32>
    %252 = vector.extract_strided_slice %251 {offsets = [0, 0], sizes = [8, 1], strides = [1, 1]} : vector<8x4xf32> to vector<8x1xf32>
    %253 = vector.extract_strided_slice %7 {offsets = [0, 0], sizes = [1, 384], strides = [1, 1]} : vector<4x384xf32> to vector<1x384xf32>
    %254 = vector.broadcast %252 : vector<8x1xf32> to vector<8x384xf32>
    %255 = vector.broadcast %253 : vector<1x384xf32> to vector<8x384xf32>
    %256 = arith.mulf %254, %255 : vector<8x384xf32>
    %257 = arith.addf %244, %256 : vector<8x384xf32>
    %258 = vector.extract_strided_slice %251 {offsets = [0, 1], sizes = [8, 1], strides = [1, 1]} : vector<8x4xf32> to vector<8x1xf32>
    %259 = vector.extract_strided_slice %7 {offsets = [1, 0], sizes = [1, 384], strides = [1, 1]} : vector<4x384xf32> to vector<1x384xf32>
    %260 = vector.broadcast %258 : vector<8x1xf32> to vector<8x384xf32>
    %261 = vector.broadcast %259 : vector<1x384xf32> to vector<8x384xf32>
    %262 = arith.mulf %260, %261 : vector<8x384xf32>
    %263 = arith.addf %250, %262 : vector<8x384xf32>
    %264 = vector.extract_strided_slice %251 {offsets = [0, 2], sizes = [8, 1], strides = [1, 1]} : vector<8x4xf32> to vector<8x1xf32>
    %265 = vector.extract_strided_slice %7 {offsets = [2, 0], sizes = [1, 384], strides = [1, 1]} : vector<4x384xf32> to vector<1x384xf32>
    %266 = vector.broadcast %264 : vector<8x1xf32> to vector<8x384xf32>
    %267 = vector.broadcast %265 : vector<1x384xf32> to vector<8x384xf32>
    %268 = arith.mulf %266, %267 : vector<8x384xf32>
    %269 = arith.addf %257, %268 : vector<8x384xf32>
    %270 = vector.extract_strided_slice %251 {offsets = [0, 3], sizes = [8, 1], strides = [1, 1]} : vector<8x4xf32> to vector<8x1xf32>
    %271 = vector.extract_strided_slice %7 {offsets = [3, 0], sizes = [1, 384], strides = [1, 1]} : vector<4x384xf32> to vector<1x384xf32>
    %272 = vector.broadcast %270 : vector<8x1xf32> to vector<8x384xf32>
    %273 = vector.broadcast %271 : vector<1x384xf32> to vector<8x384xf32>
    %274 = arith.mulf %272, %273 : vector<8x384xf32>
    %275 = arith.addf %263, %274 : vector<8x384xf32>
    %276 = vector.extract_strided_slice %223 {offsets = [0, 8], sizes = [8, 4], strides = [1, 1]} : vector<8x16xf32> to vector<8x4xf32>
    %277 = vector.extract_strided_slice %276 {offsets = [0, 0], sizes = [8, 1], strides = [1, 1]} : vector<8x4xf32> to vector<8x1xf32>
    %278 = vector.extract_strided_slice %9 {offsets = [0, 0], sizes = [1, 384], strides = [1, 1]} : vector<4x384xf32> to vector<1x384xf32>
    %279 = vector.broadcast %277 : vector<8x1xf32> to vector<8x384xf32>
    %280 = vector.broadcast %278 : vector<1x384xf32> to vector<8x384xf32>
    %281 = arith.mulf %279, %280 : vector<8x384xf32>
    %282 = arith.addf %269, %281 : vector<8x384xf32>
    %283 = vector.extract_strided_slice %276 {offsets = [0, 1], sizes = [8, 1], strides = [1, 1]} : vector<8x4xf32> to vector<8x1xf32>
    %284 = vector.extract_strided_slice %9 {offsets = [1, 0], sizes = [1, 384], strides = [1, 1]} : vector<4x384xf32> to vector<1x384xf32>
    %285 = vector.broadcast %283 : vector<8x1xf32> to vector<8x384xf32>
    %286 = vector.broadcast %284 : vector<1x384xf32> to vector<8x384xf32>
    %287 = arith.mulf %285, %286 : vector<8x384xf32>
    %288 = arith.addf %275, %287 : vector<8x384xf32>
    %289 = vector.extract_strided_slice %276 {offsets = [0, 2], sizes = [8, 1], strides = [1, 1]} : vector<8x4xf32> to vector<8x1xf32>
    %290 = vector.extract_strided_slice %9 {offsets = [2, 0], sizes = [1, 384], strides = [1, 1]} : vector<4x384xf32> to vector<1x384xf32>
    %291 = vector.broadcast %289 : vector<8x1xf32> to vector<8x384xf32>
    %292 = vector.broadcast %290 : vector<1x384xf32> to vector<8x384xf32>
    %293 = arith.mulf %291, %292 : vector<8x384xf32>
    %294 = arith.addf %282, %293 : vector<8x384xf32>
    %295 = vector.extract_strided_slice %276 {offsets = [0, 3], sizes = [8, 1], strides = [1, 1]} : vector<8x4xf32> to vector<8x1xf32>
    %296 = vector.extract_strided_slice %9 {offsets = [3, 0], sizes = [1, 384], strides = [1, 1]} : vector<4x384xf32> to vector<1x384xf32>
    %297 = vector.broadcast %295 : vector<8x1xf32> to vector<8x384xf32>
    %298 = vector.broadcast %296 : vector<1x384xf32> to vector<8x384xf32>
    %299 = arith.mulf %297, %298 : vector<8x384xf32>
    %300 = arith.addf %288, %299 : vector<8x384xf32>
    %301 = vector.extract_strided_slice %223 {offsets = [0, 12], sizes = [8, 4], strides = [1, 1]} : vector<8x16xf32> to vector<8x4xf32>
    %302 = vector.extract_strided_slice %301 {offsets = [0, 0], sizes = [8, 1], strides = [1, 1]} : vector<8x4xf32> to vector<8x1xf32>
    %303 = vector.extract_strided_slice %10 {offsets = [0, 0], sizes = [1, 384], strides = [1, 1]} : vector<4x384xf32> to vector<1x384xf32>
    %304 = vector.broadcast %302 : vector<8x1xf32> to vector<8x384xf32>
    %305 = vector.broadcast %303 : vector<1x384xf32> to vector<8x384xf32>
    %306 = arith.mulf %304, %305 : vector<8x384xf32>
    %307 = arith.addf %294, %306 : vector<8x384xf32>
    %308 = vector.extract_strided_slice %301 {offsets = [0, 1], sizes = [8, 1], strides = [1, 1]} : vector<8x4xf32> to vector<8x1xf32>
    %309 = vector.extract_strided_slice %10 {offsets = [1, 0], sizes = [1, 384], strides = [1, 1]} : vector<4x384xf32> to vector<1x384xf32>
    %310 = vector.broadcast %308 : vector<8x1xf32> to vector<8x384xf32>
    %311 = vector.broadcast %309 : vector<1x384xf32> to vector<8x384xf32>
    %312 = arith.mulf %310, %311 : vector<8x384xf32>
    %313 = arith.addf %300, %312 : vector<8x384xf32>
    %314 = vector.extract_strided_slice %301 {offsets = [0, 2], sizes = [8, 1], strides = [1, 1]} : vector<8x4xf32> to vector<8x1xf32>
    %315 = vector.extract_strided_slice %10 {offsets = [2, 0], sizes = [1, 384], strides = [1, 1]} : vector<4x384xf32> to vector<1x384xf32>
    %316 = vector.broadcast %314 : vector<8x1xf32> to vector<8x384xf32>
    %317 = vector.broadcast %315 : vector<1x384xf32> to vector<8x384xf32>
    %318 = arith.mulf %316, %317 : vector<8x384xf32>
    %319 = arith.addf %307, %318 : vector<8x384xf32>
    %320 = vector.extract_strided_slice %301 {offsets = [0, 3], sizes = [8, 1], strides = [1, 1]} : vector<8x4xf32> to vector<8x1xf32>
    %321 = vector.extract_strided_slice %10 {offsets = [3, 0], sizes = [1, 384], strides = [1, 1]} : vector<4x384xf32> to vector<1x384xf32>
    %322 = vector.broadcast %320 : vector<8x1xf32> to vector<8x384xf32>
    %323 = vector.broadcast %321 : vector<1x384xf32> to vector<8x384xf32>
    %324 = arith.mulf %322, %323 : vector<8x384xf32>
    %325 = arith.addf %313, %324 : vector<8x384xf32>
    %326 = arith.addf %319, %325 : vector<8x384xf32>
    %c3 = arith.constant 3 : index
    %c0_16 = arith.constant 0 : index
    %c0_17 = arith.constant 0 : index
    %327 = vector.load %arg2[%c3, %c0_16, %c0_17] : memref<4x8x16xf32, #tpu.memory_space<vmem>>, vector<1x8x16xf32>
    %328 = vector.shape_cast %327 : vector<1x8x16xf32> to vector<8x16xf32>
    %cst_18 = arith.constant 0.000000e+00 : f32
    %329 = vector.broadcast %cst_18 : f32 to vector<8x384xf32>
    %cst_19 = arith.constant 0.000000e+00 : f32
    %330 = vector.broadcast %cst_19 : f32 to vector<8x384xf32>
    %331 = vector.extract_strided_slice %328 {offsets = [0, 0], sizes = [8, 4], strides = [1, 1]} : vector<8x16xf32> to vector<8x4xf32>
    %332 = vector.extract_strided_slice %331 {offsets = [0, 0], sizes = [8, 1], strides = [1, 1]} : vector<8x4xf32> to vector<8x1xf32>
    %333 = vector.extract_strided_slice %7 {offsets = [0, 0], sizes = [1, 384], strides = [1, 1]} : vector<4x384xf32> to vector<1x384xf32>
    %334 = vector.broadcast %332 : vector<8x1xf32> to vector<8x384xf32>
    %335 = vector.broadcast %333 : vector<1x384xf32> to vector<8x384xf32>
    %336 = arith.mulf %334, %335 : vector<8x384xf32>
    %337 = arith.addf %329, %336 : vector<8x384xf32>
    %338 = vector.extract_strided_slice %331 {offsets = [0, 1], sizes = [8, 1], strides = [1, 1]} : vector<8x4xf32> to vector<8x1xf32>
    %339 = vector.extract_strided_slice %7 {offsets = [1, 0], sizes = [1, 384], strides = [1, 1]} : vector<4x384xf32> to vector<1x384xf32>
    %340 = vector.broadcast %338 : vector<8x1xf32> to vector<8x384xf32>
    %341 = vector.broadcast %339 : vector<1x384xf32> to vector<8x384xf32>
    %342 = arith.mulf %340, %341 : vector<8x384xf32>
    %343 = arith.addf %330, %342 : vector<8x384xf32>
    %344 = vector.extract_strided_slice %331 {offsets = [0, 2], sizes = [8, 1], strides = [1, 1]} : vector<8x4xf32> to vector<8x1xf32>
    %345 = vector.extract_strided_slice %7 {offsets = [2, 0], sizes = [1, 384], strides = [1, 1]} : vector<4x384xf32> to vector<1x384xf32>
    %346 = vector.broadcast %344 : vector<8x1xf32> to vector<8x384xf32>
    %347 = vector.broadcast %345 : vector<1x384xf32> to vector<8x384xf32>
    %348 = arith.mulf %346, %347 : vector<8x384xf32>
    %349 = arith.addf %337, %348 : vector<8x384xf32>
    %350 = vector.extract_strided_slice %331 {offsets = [0, 3], sizes = [8, 1], strides = [1, 1]} : vector<8x4xf32> to vector<8x1xf32>
    %351 = vector.extract_strided_slice %7 {offsets = [3, 0], sizes = [1, 384], strides = [1, 1]} : vector<4x384xf32> to vector<1x384xf32>
    %352 = vector.broadcast %350 : vector<8x1xf32> to vector<8x384xf32>
    %353 = vector.broadcast %351 : vector<1x384xf32> to vector<8x384xf32>
    %354 = arith.mulf %352, %353 : vector<8x384xf32>
    %355 = arith.addf %343, %354 : vector<8x384xf32>
    %356 = vector.extract_strided_slice %328 {offsets = [0, 4], sizes = [8, 4], strides = [1, 1]} : vector<8x16xf32> to vector<8x4xf32>
    %357 = vector.extract_strided_slice %356 {offsets = [0, 0], sizes = [8, 1], strides = [1, 1]} : vector<8x4xf32> to vector<8x1xf32>
    %358 = vector.extract_strided_slice %8 {offsets = [0, 0], sizes = [1, 384], strides = [1, 1]} : vector<4x384xf32> to vector<1x384xf32>
    %359 = vector.broadcast %357 : vector<8x1xf32> to vector<8x384xf32>
    %360 = vector.broadcast %358 : vector<1x384xf32> to vector<8x384xf32>
    %361 = arith.mulf %359, %360 : vector<8x384xf32>
    %362 = arith.addf %349, %361 : vector<8x384xf32>
    %363 = vector.extract_strided_slice %356 {offsets = [0, 1], sizes = [8, 1], strides = [1, 1]} : vector<8x4xf32> to vector<8x1xf32>
    %364 = vector.extract_strided_slice %8 {offsets = [1, 0], sizes = [1, 384], strides = [1, 1]} : vector<4x384xf32> to vector<1x384xf32>
    %365 = vector.broadcast %363 : vector<8x1xf32> to vector<8x384xf32>
    %366 = vector.broadcast %364 : vector<1x384xf32> to vector<8x384xf32>
    %367 = arith.mulf %365, %366 : vector<8x384xf32>
    %368 = arith.addf %355, %367 : vector<8x384xf32>
    %369 = vector.extract_strided_slice %356 {offsets = [0, 2], sizes = [8, 1], strides = [1, 1]} : vector<8x4xf32> to vector<8x1xf32>
    %370 = vector.extract_strided_slice %8 {offsets = [2, 0], sizes = [1, 384], strides = [1, 1]} : vector<4x384xf32> to vector<1x384xf32>
    %371 = vector.broadcast %369 : vector<8x1xf32> to vector<8x384xf32>
    %372 = vector.broadcast %370 : vector<1x384xf32> to vector<8x384xf32>
    %373 = arith.mulf %371, %372 : vector<8x384xf32>
    %374 = arith.addf %362, %373 : vector<8x384xf32>
    %375 = vector.extract_strided_slice %356 {offsets = [0, 3], sizes = [8, 1], strides = [1, 1]} : vector<8x4xf32> to vector<8x1xf32>
    %376 = vector.extract_strided_slice %8 {offsets = [3, 0], sizes = [1, 384], strides = [1, 1]} : vector<4x384xf32> to vector<1x384xf32>
    %377 = vector.broadcast %375 : vector<8x1xf32> to vector<8x384xf32>
    %378 = vector.broadcast %376 : vector<1x384xf32> to vector<8x384xf32>
    %379 = arith.mulf %377, %378 : vector<8x384xf32>
    %380 = arith.addf %368, %379 : vector<8x384xf32>
    %381 = vector.extract_strided_slice %328 {offsets = [0, 8], sizes = [8, 4], strides = [1, 1]} : vector<8x16xf32> to vector<8x4xf32>
    %382 = vector.extract_strided_slice %381 {offsets = [0, 0], sizes = [8, 1], strides = [1, 1]} : vector<8x4xf32> to vector<8x1xf32>
    %383 = vector.extract_strided_slice %10 {offsets = [0, 0], sizes = [1, 384], strides = [1, 1]} : vector<4x384xf32> to vector<1x384xf32>
    %384 = vector.broadcast %382 : vector<8x1xf32> to vector<8x384xf32>
    %385 = vector.broadcast %383 : vector<1x384xf32> to vector<8x384xf32>
    %386 = arith.mulf %384, %385 : vector<8x384xf32>
    %387 = arith.addf %374, %386 : vector<8x384xf32>
    %388 = vector.extract_strided_slice %381 {offsets = [0, 1], sizes = [8, 1], strides = [1, 1]} : vector<8x4xf32> to vector<8x1xf32>
    %389 = vector.extract_strided_slice %10 {offsets = [1, 0], sizes = [1, 384], strides = [1, 1]} : vector<4x384xf32> to vector<1x384xf32>
    %390 = vector.broadcast %388 : vector<8x1xf32> to vector<8x384xf32>
    %391 = vector.broadcast %389 : vector<1x384xf32> to vector<8x384xf32>
    %392 = arith.mulf %390, %391 : vector<8x384xf32>
    %393 = arith.addf %380, %392 : vector<8x384xf32>
    %394 = vector.extract_strided_slice %381 {offsets = [0, 2], sizes = [8, 1], strides = [1, 1]} : vector<8x4xf32> to vector<8x1xf32>
    %395 = vector.extract_strided_slice %10 {offsets = [2, 0], sizes = [1, 384], strides = [1, 1]} : vector<4x384xf32> to vector<1x384xf32>
    %396 = vector.broadcast %394 : vector<8x1xf32> to vector<8x384xf32>
    %397 = vector.broadcast %395 : vector<1x384xf32> to vector<8x384xf32>
    %398 = arith.mulf %396, %397 : vector<8x384xf32>
    %399 = arith.addf %387, %398 : vector<8x384xf32>
    %400 = vector.extract_strided_slice %381 {offsets = [0, 3], sizes = [8, 1], strides = [1, 1]} : vector<8x4xf32> to vector<8x1xf32>
    %401 = vector.extract_strided_slice %10 {offsets = [3, 0], sizes = [1, 384], strides = [1, 1]} : vector<4x384xf32> to vector<1x384xf32>
    %402 = vector.broadcast %400 : vector<8x1xf32> to vector<8x384xf32>
    %403 = vector.broadcast %401 : vector<1x384xf32> to vector<8x384xf32>
    %404 = arith.mulf %402, %403 : vector<8x384xf32>
    %405 = arith.addf %393, %404 : vector<8x384xf32>
    %406 = vector.extract_strided_slice %328 {offsets = [0, 12], sizes = [8, 4], strides = [1, 1]} : vector<8x16xf32> to vector<8x4xf32>
    %407 = vector.extract_strided_slice %406 {offsets = [0, 0], sizes = [8, 1], strides = [1, 1]} : vector<8x4xf32> to vector<8x1xf32>
    %408 = vector.extract_strided_slice %11 {offsets = [0, 0], sizes = [1, 384], strides = [1, 1]} : vector<4x384xf32> to vector<1x384xf32>
    %409 = vector.broadcast %407 : vector<8x1xf32> to vector<8x384xf32>
    %410 = vector.broadcast %408 : vector<1x384xf32> to vector<8x384xf32>
    %411 = arith.mulf %409, %410 : vector<8x384xf32>
    %412 = arith.addf %399, %411 : vector<8x384xf32>
    %413 = vector.extract_strided_slice %406 {offsets = [0, 1], sizes = [8, 1], strides = [1, 1]} : vector<8x4xf32> to vector<8x1xf32>
    %414 = vector.extract_strided_slice %11 {offsets = [1, 0], sizes = [1, 384], strides = [1, 1]} : vector<4x384xf32> to vector<1x384xf32>
    %415 = vector.broadcast %413 : vector<8x1xf32> to vector<8x384xf32>
    %416 = vector.broadcast %414 : vector<1x384xf32> to vector<8x384xf32>
    %417 = arith.mulf %415, %416 : vector<8x384xf32>
    %418 = arith.addf %405, %417 : vector<8x384xf32>
    %419 = vector.extract_strided_slice %406 {offsets = [0, 2], sizes = [8, 1], strides = [1, 1]} : vector<8x4xf32> to vector<8x1xf32>
    %420 = vector.extract_strided_slice %11 {offsets = [2, 0], sizes = [1, 384], strides = [1, 1]} : vector<4x384xf32> to vector<1x384xf32>
    %421 = vector.broadcast %419 : vector<8x1xf32> to vector<8x384xf32>
    %422 = vector.broadcast %420 : vector<1x384xf32> to vector<8x384xf32>
    %423 = arith.mulf %421, %422 : vector<8x384xf32>
    %424 = arith.addf %412, %423 : vector<8x384xf32>
    %425 = vector.extract_strided_slice %406 {offsets = [0, 3], sizes = [8, 1], strides = [1, 1]} : vector<8x4xf32> to vector<8x1xf32>
    %426 = vector.extract_strided_slice %11 {offsets = [3, 0], sizes = [1, 384], strides = [1, 1]} : vector<4x384xf32> to vector<1x384xf32>
    %427 = vector.broadcast %425 : vector<8x1xf32> to vector<8x384xf32>
    %428 = vector.broadcast %426 : vector<1x384xf32> to vector<8x384xf32>
    %429 = arith.mulf %427, %428 : vector<8x384xf32>
    %430 = arith.addf %418, %429 : vector<8x384xf32>
    %431 = arith.addf %424, %430 : vector<8x384xf32>
    %cst_20 = arith.constant 0.000000e+00 : f32
    %432 = vector.broadcast %cst_20 : f32 to vector<8x1xf32>
    %433 = vector.broadcast %2 : vector<1x384xf32> to vector<8x384xf32>
    %434 = arith.mulf %116, %433 : vector<8x384xf32>
    %cst_21 = arith.constant dense<0.000000e+00> : vector<8xf32>
    %435 = vector.multi_reduction <add>, %434, %cst_21 [1] : vector<8x384xf32> to vector<8xf32>
    %436 = vector.shape_cast %435 : vector<8xf32> to vector<8x1xf32>
    %437 = arith.addf %432, %436 : vector<8x1xf32>
    %438 = vector.broadcast %2 : vector<1x384xf32> to vector<8x384xf32>
    %439 = arith.mulf %221, %438 : vector<8x384xf32>
    %cst_22 = arith.constant dense<0.000000e+00> : vector<8xf32>
    %440 = vector.multi_reduction <add>, %439, %cst_22 [1] : vector<8x384xf32> to vector<8xf32>
    %441 = vector.shape_cast %440 : vector<8xf32> to vector<8x1xf32>
    %442 = arith.addf %437, %441 : vector<8x1xf32>
    %443 = vector.broadcast %2 : vector<1x384xf32> to vector<8x384xf32>
    %444 = arith.mulf %326, %443 : vector<8x384xf32>
    %cst_23 = arith.constant dense<0.000000e+00> : vector<8xf32>
    %445 = vector.multi_reduction <add>, %444, %cst_23 [1] : vector<8x384xf32> to vector<8xf32>
    %446 = vector.shape_cast %445 : vector<8xf32> to vector<8x1xf32>
    %447 = arith.addf %442, %446 : vector<8x1xf32>
    %448 = vector.broadcast %2 : vector<1x384xf32> to vector<8x384xf32>
    %449 = arith.mulf %431, %448 : vector<8x384xf32>
    %cst_24 = arith.constant dense<0.000000e+00> : vector<8xf32>
    %450 = vector.multi_reduction <add>, %449, %cst_24 [1] : vector<8x384xf32> to vector<8xf32>
    %451 = vector.shape_cast %450 : vector<8xf32> to vector<8x1xf32>
    %452 = arith.addf %447, %451 : vector<8x1xf32>
    %cst_25 = arith.constant 9.765625E-4 : f32
    %453 = vector.broadcast %cst_25 : f32 to vector<8x1xf32>
    %454 = arith.mulf %452, %453 : vector<8x1xf32>
    %cst_26 = arith.constant 0.000000e+00 : f32
    %455 = vector.broadcast %cst_26 : f32 to vector<8x1xf32>
    %456 = vector.broadcast %454 : vector<8x1xf32> to vector<8x384xf32>
    %457 = arith.subf %116, %456 : vector<8x384xf32>
    %458 = vector.broadcast %2 : vector<1x384xf32> to vector<8x384xf32>
    %459 = arith.mulf %457, %458 : vector<8x384xf32>
    %460 = arith.mulf %459, %459 : vector<8x384xf32>
    %cst_27 = arith.constant dense<0.000000e+00> : vector<8xf32>
    %461 = vector.multi_reduction <add>, %460, %cst_27 [1] : vector<8x384xf32> to vector<8xf32>
    %462 = vector.shape_cast %461 : vector<8xf32> to vector<8x1xf32>
    %463 = arith.addf %455, %462 : vector<8x1xf32>
    %464 = vector.broadcast %454 : vector<8x1xf32> to vector<8x384xf32>
    %465 = arith.subf %221, %464 : vector<8x384xf32>
    %466 = vector.broadcast %2 : vector<1x384xf32> to vector<8x384xf32>
    %467 = arith.mulf %465, %466 : vector<8x384xf32>
    %468 = arith.mulf %467, %467 : vector<8x384xf32>
    %cst_28 = arith.constant dense<0.000000e+00> : vector<8xf32>
    %469 = vector.multi_reduction <add>, %468, %cst_28 [1] : vector<8x384xf32> to vector<8xf32>
    %470 = vector.shape_cast %469 : vector<8xf32> to vector<8x1xf32>
    %471 = arith.addf %463, %470 : vector<8x1xf32>
    %472 = vector.broadcast %454 : vector<8x1xf32> to vector<8x384xf32>
    %473 = arith.subf %326, %472 : vector<8x384xf32>
    %474 = vector.broadcast %2 : vector<1x384xf32> to vector<8x384xf32>
    %475 = arith.mulf %473, %474 : vector<8x384xf32>
    %476 = arith.mulf %475, %475 : vector<8x384xf32>
    %cst_29 = arith.constant dense<0.000000e+00> : vector<8xf32>
    %477 = vector.multi_reduction <add>, %476, %cst_29 [1] : vector<8x384xf32> to vector<8xf32>
    %478 = vector.shape_cast %477 : vector<8xf32> to vector<8x1xf32>
    %479 = arith.addf %471, %478 : vector<8x1xf32>
    %480 = vector.broadcast %454 : vector<8x1xf32> to vector<8x384xf32>
    %481 = arith.subf %431, %480 : vector<8x384xf32>
    %482 = vector.broadcast %2 : vector<1x384xf32> to vector<8x384xf32>
    %483 = arith.mulf %481, %482 : vector<8x384xf32>
    %484 = arith.mulf %483, %483 : vector<8x384xf32>
    %cst_30 = arith.constant dense<0.000000e+00> : vector<8xf32>
    %485 = vector.multi_reduction <add>, %484, %cst_30 [1] : vector<8x384xf32> to vector<8xf32>
    %486 = vector.shape_cast %485 : vector<8xf32> to vector<8x1xf32>
    %487 = arith.addf %479, %486 : vector<8x1xf32>
    %cst_31 = arith.constant 9.77517105E-4 : f32
    %488 = vector.broadcast %cst_31 : f32 to vector<8x1xf32>
    %489 = arith.mulf %487, %488 : vector<8x1xf32>
    %c3_32 = arith.constant 3 : index
    %c0_33 = arith.constant 0 : index
    %c0_34 = arith.constant 0 : index
    %490 = vector.load %arg4[%c3_32, %c0_33, %c0_34] : memref<4x8x1xf32, #tpu.memory_space<vmem>>, vector<1x8x1xf32>
    %491 = vector.shape_cast %490 : vector<1x8x1xf32> to vector<8x1xf32>
    %cst_35 = arith.constant dense<0.000000e+00> : vector<1xf32>
    %492 = vector.multi_reduction <add>, %452, %cst_35 [0] : vector<8x1xf32> to vector<1xf32>
    %493 = vector.shape_cast %492 : vector<1xf32> to vector<1x1xf32>
    %cst_36 = arith.constant 4.8828125E-4 : f32
    %494 = vector.broadcast %cst_36 : f32 to vector<1x1xf32>
    %495 = arith.mulf %493, %494 : vector<1x1xf32>
    %496 = vector.broadcast %495 : vector<1x1xf32> to vector<8x1xf32>
    %497 = arith.subf %454, %496 : vector<8x1xf32>
    %498 = arith.mulf %497, %491 : vector<8x1xf32>
    %cst_37 = arith.constant dense<0.000000e+00> : vector<1xf32>
    %499 = vector.multi_reduction <add>, %487, %cst_37 [0] : vector<8x1xf32> to vector<1xf32>
    %500 = vector.shape_cast %499 : vector<1xf32> to vector<1x1xf32>
    %501 = arith.mulf %498, %498 : vector<8x1xf32>
    %cst_38 = arith.constant dense<0.000000e+00> : vector<1xf32>
    %502 = vector.multi_reduction <add>, %501, %cst_38 [0] : vector<8x1xf32> to vector<1xf32>
    %503 = vector.shape_cast %502 : vector<1xf32> to vector<1x1xf32>
    %cst_39 = arith.constant 1.024000e+03 : f32
    %504 = vector.broadcast %cst_39 : f32 to vector<1x1xf32>
    %505 = arith.mulf %504, %503 : vector<1x1xf32>
    %506 = arith.addf %500, %505 : vector<1x1xf32>
    %cst_40 = arith.constant 4.88519785E-4 : f32
    %507 = vector.broadcast %cst_40 : f32 to vector<1x1xf32>
    %508 = arith.mulf %506, %507 : vector<1x1xf32>
    %c0_41 = arith.constant 0 : index
    %c0_42 = arith.constant 0 : index
    %c0_43 = arith.constant 0 : index
    %509 = vector.load %arg4[%c0_41, %c0_42, %c0_43] : memref<4x8x1xf32, #tpu.memory_space<vmem>>, vector<1x8x1xf32>
    %510 = vector.shape_cast %509 : vector<1x8x1xf32> to vector<8x1xf32>
    %c1_44 = arith.constant 1 : index
    %c0_45 = arith.constant 0 : index
    %c0_46 = arith.constant 0 : index
    %511 = vector.load %arg4[%c1_44, %c0_45, %c0_46] : memref<4x8x1xf32, #tpu.memory_space<vmem>>, vector<1x8x1xf32>
    %512 = vector.shape_cast %511 : vector<1x8x1xf32> to vector<8x1xf32>
    %c2_47 = arith.constant 2 : index
    %c0_48 = arith.constant 0 : index
    %c0_49 = arith.constant 0 : index
    %513 = vector.load %arg4[%c2_47, %c0_48, %c0_49] : memref<4x8x1xf32, #tpu.memory_space<vmem>>, vector<1x8x1xf32>
    %514 = vector.shape_cast %513 : vector<1x8x1xf32> to vector<8x1xf32>
    %cst_50 = arith.constant 9.99999974E-6 : f32
    %515 = vector.broadcast %cst_50 : f32 to vector<8x1xf32>
    %516 = arith.addf %489, %515 : vector<8x1xf32>
    %517 = math.rsqrt %516 : vector<8x1xf32>
    %cst_51 = arith.constant 9.99999974E-6 : f32
    %518 = vector.broadcast %cst_51 : f32 to vector<1x1xf32>
    %519 = arith.addf %508, %518 : vector<1x1xf32>
    %520 = math.rsqrt %519 : vector<1x1xf32>
    %521 = arith.mulf %510, %517 : vector<8x1xf32>
    %cst_52 = arith.constant 1.000000e+00 : f32
    %522 = vector.broadcast %cst_52 : f32 to vector<8x1xf32>
    %523 = arith.subf %522, %510 : vector<8x1xf32>
    %524 = vector.broadcast %520 : vector<1x1xf32> to vector<8x1xf32>
    %525 = arith.mulf %523, %524 : vector<8x1xf32>
    %526 = arith.addf %521, %525 : vector<8x1xf32>
    %527 = arith.mulf %510, %454 : vector<8x1xf32>
    %528 = arith.mulf %527, %517 : vector<8x1xf32>
    %cst_53 = arith.constant 1.000000e+00 : f32
    %529 = vector.broadcast %cst_53 : f32 to vector<8x1xf32>
    %530 = arith.subf %529, %510 : vector<8x1xf32>
    %531 = vector.broadcast %495 : vector<1x1xf32> to vector<8x1xf32>
    %532 = arith.mulf %530, %531 : vector<8x1xf32>
    %533 = vector.broadcast %520 : vector<1x1xf32> to vector<8x1xf32>
    %534 = arith.mulf %532, %533 : vector<8x1xf32>
    %535 = arith.addf %528, %534 : vector<8x1xf32>
    %cst_54 = arith.constant 0.000000e+00 : f32
    %536 = vector.broadcast %cst_54 : f32 to vector<8x1xf32>
    %537 = arith.subf %536, %535 : vector<8x1xf32>
    %538 = arith.mulf %512, %526 : vector<8x1xf32>
    %539 = arith.mulf %512, %537 : vector<8x1xf32>
    %540 = arith.addf %539, %514 : vector<8x1xf32>
    %541 = vector.broadcast %538 : vector<8x1xf32> to vector<8x384xf32>
    %542 = arith.mulf %116, %541 : vector<8x384xf32>
    %543 = vector.broadcast %540 : vector<8x1xf32> to vector<8x384xf32>
    %544 = arith.addf %542, %543 : vector<8x384xf32>
    %cst_55 = arith.constant 0.000000e+00 : f32
    %545 = vector.broadcast %cst_55 : f32 to vector<8x384xf32>
    %546 = arith.maximumf %544, %545 : vector<8x384xf32>
    %c0_56 = arith.constant 0 : index
    %c0_57 = arith.constant 0 : index
    %c0_58 = arith.constant 0 : index
    %c0_59 = arith.constant 0 : index
    %547 = vector.load %arg5[%c0_56, %c0_57, %c0_58, %c0_59] : memref<1x4x8x384xf32, #tpu.memory_space<vmem>>, vector<1x1x8x384xf32>
    %548 = vector.shape_cast %547 : vector<1x1x8x384xf32> to vector<8x384xf32>
    %549 = vector.shape_cast %546 : vector<8x384xf32> to vector<1x1x8x384xf32>
    tpu.vector_store %arg5[%c0_56, %c0_57, %c0_58, %c0_59], %549 {strides = array<i32>} : memref<1x4x8x384xf32, #tpu.memory_space<vmem>>, vector<1x1x8x384xf32>,
    %550 = vector.broadcast %538 : vector<8x1xf32> to vector<8x384xf32>
    %551 = arith.mulf %221, %550 : vector<8x384xf32>
    %552 = vector.broadcast %540 : vector<8x1xf32> to vector<8x384xf32>
    %553 = arith.addf %551, %552 : vector<8x384xf32>
    %cst_60 = arith.constant 0.000000e+00 : f32
    %554 = vector.broadcast %cst_60 : f32 to vector<8x384xf32>
    %555 = arith.maximumf %553, %554 : vector<8x384xf32>
    %c0_61 = arith.constant 0 : index
    %c1_62 = arith.constant 1 : index
    %c0_63 = arith.constant 0 : index
    %c0_64 = arith.constant 0 : index
    %556 = vector.load %arg5[%c0_61, %c1_62, %c0_63, %c0_64] : memref<1x4x8x384xf32, #tpu.memory_space<vmem>>, vector<1x1x8x384xf32>
    %557 = vector.shape_cast %556 : vector<1x1x8x384xf32> to vector<8x384xf32>
    %558 = vector.shape_cast %555 : vector<8x384xf32> to vector<1x1x8x384xf32>
    tpu.vector_store %arg5[%c0_61, %c1_62, %c0_63, %c0_64], %558 {strides = array<i32>} : memref<1x4x8x384xf32, #tpu.memory_space<vmem>>, vector<1x1x8x384xf32>,
    %559 = vector.broadcast %538 : vector<8x1xf32> to vector<8x384xf32>
    %560 = arith.mulf %326, %559 : vector<8x384xf32>
    %561 = vector.broadcast %540 : vector<8x1xf32> to vector<8x384xf32>
    %562 = arith.addf %560, %561 : vector<8x384xf32>
    %cst_65 = arith.constant 0.000000e+00 : f32
    %563 = vector.broadcast %cst_65 : f32 to vector<8x384xf32>
    %564 = arith.maximumf %562, %563 : vector<8x384xf32>
    %c0_66 = arith.constant 0 : index
    %c2_67 = arith.constant 2 : index
    %c0_68 = arith.constant 0 : index
    %c0_69 = arith.constant 0 : index
    %565 = vector.load %arg5[%c0_66, %c2_67, %c0_68, %c0_69] : memref<1x4x8x384xf32, #tpu.memory_space<vmem>>, vector<1x1x8x384xf32>
    %566 = vector.shape_cast %565 : vector<1x1x8x384xf32> to vector<8x384xf32>
    %567 = vector.shape_cast %564 : vector<8x384xf32> to vector<1x1x8x384xf32>
    tpu.vector_store %arg5[%c0_66, %c2_67, %c0_68, %c0_69], %567 {strides = array<i32>} : memref<1x4x8x384xf32, #tpu.memory_space<vmem>>, vector<1x1x8x384xf32>,
    %568 = vector.broadcast %538 : vector<8x1xf32> to vector<8x384xf32>
    %569 = arith.mulf %431, %568 : vector<8x384xf32>
    %570 = vector.broadcast %540 : vector<8x1xf32> to vector<8x384xf32>
    %571 = arith.addf %569, %570 : vector<8x384xf32>
    %cst_70 = arith.constant 0.000000e+00 : f32
    %572 = vector.broadcast %cst_70 : f32 to vector<8x384xf32>
    %573 = arith.maximumf %571, %572 : vector<8x384xf32>
    %c0_71 = arith.constant 0 : index
    %c3_72 = arith.constant 3 : index
    %c0_73 = arith.constant 0 : index
    %c0_74 = arith.constant 0 : index
    %574 = vector.load %arg5[%c0_71, %c3_72, %c0_73, %c0_74] : memref<1x4x8x384xf32, #tpu.memory_space<vmem>>, vector<1x1x8x384xf32>
    %575 = vector.shape_cast %574 : vector<1x1x8x384xf32> to vector<8x384xf32>
    %576 = vector.shape_cast %573 : vector<8x384xf32> to vector<1x1x8x384xf32>
    tpu.vector_store %arg5[%c0_71, %c3_72, %c0_73, %c0_74], %576 {strides = array<i32>} : memref<1x4x8x384xf32, #tpu.memory_space<vmem>>, vector<1x1x8x384xf32>,
    return
  }
  func.func @transform_0(%arg0: i32) -> (i32, i32, i32) {
    %c0_i32 = arith.constant 0 : i32
    %c0_i32_0 = arith.constant 0 : i32
    %c0_i32_1 = arith.constant 0 : i32
    return %arg0, %c0_i32, %c0_i32_0 : i32, i32, i32
  }
  func.func @transform_1(%arg0: i32) -> (i32, i32, i32) {
    %c0_i32 = arith.constant 0 : i32
    %c0_i32_0 = arith.constant 0 : i32
    %c0_i32_1 = arith.constant 0 : i32
    %c0_i32_2 = arith.constant 0 : i32
    return %c0_i32, %c0_i32_0, %c0_i32_1 : i32, i32, i32
  }
  func.func @transform_2(%arg0: i32) -> (i32, i32) {
    %c0_i32 = arith.constant 0 : i32
    %c0_i32_0 = arith.constant 0 : i32
    %c0_i32_1 = arith.constant 0 : i32
    return %c0_i32, %c0_i32_0 : i32, i32
  }
  func.func @transform_3(%arg0: i32) -> (i32, i32, i32) {
    %c0_i32 = arith.constant 0 : i32
    %c0_i32_0 = arith.constant 0 : i32
    %c0_i32_1 = arith.constant 0 : i32
    %c0_i32_2 = arith.constant 0 : i32
    return %c0_i32, %c0_i32_0, %c0_i32_1 : i32, i32, i32
  }
  func.func @transform_4(%arg0: i32) -> (i32, i32, i32, i32) {
    %c0_i32 = arith.constant 0 : i32
    %c0_i32_0 = arith.constant 0 : i32
    %c0_i32_1 = arith.constant 0 : i32
    %c0_i32_2 = arith.constant 0 : i32
    return %arg0, %c0_i32, %c0_i32_0, %c0_i32_1 : i32, i32, i32, i32
  }
}

</mosaic_0001>

<llo_original>
// kernel: tpu_custom_call.1
$region0: #{tpu_custom_call.1}
  #allocation0 [shape = 'u32[]', space=smem, size = 0x4, offset = 0x4, fixed_abs, tag = 'smem constant byte address 0x4 - core index']
  #allocation1 [shape = 'u32[144,128]{1,0:T(1,128)}', space=vmem, size = 0x12000, scoped, tag = 'internal scratch']
  %s0 = inlined_call_operand.vmem [shape: f32[2,4,512], index: 0, kind: input, shape index: {}]
  %s1 = inlined_call_operand.hbm [shape: f32[4,8,16], index: 1, kind: input, shape index: {}]
  %s2 = inlined_call_operand.vmem [shape: f32[1,384], index: 2, kind: input, shape index: {}]
  %s3 = inlined_call_operand.vmem [shape: f32[4,8,1], index: 3, kind: input, shape index: {}]
  %s4 = inlined_call_operand.hbm [shape: f32[2,4,8,384], index: 4, kind: output, shape index: {}]
  %s5 = sld [smem:[#allocation0]]
  $region53: #{tpu_custom_call.1} parent=0
    _
  %s7 = ssub.s32 1, %s5
  %s8 = scalar_select 0, %s7, %s5
  $region1: #{tpu_custom_call.1} parent=0
    #allocation2 [shape = 'u8[16384]{0}', space=vmem, size = 0x4000, scoped, tag = 'input window, operand 1, single buffered']
    #allocation3 [shape = 's32[2]{0}', space=sflag, size = 0x8, scoped, tag = 'scoped memory for tpu_custom_call.1']
    #allocation4 [shape = 's32[2]{0}', space=sflag, size = 0x8, scoped, tag = 'scoped memory for tpu_custom_call.1']
    #allocation5 [shape = 'u8[98304]{0}', space=vmem, size = 0x18000, scoped, tag = 'output window, operand 0']
    %9 = vsyncpa [#allocation3], 0
    %10 = vsyncpa [#allocation4], 0
    %s11 = scalar_lea.sflag [#allocation4], 1
    %12 = vsyncpa %s11, 0
    loop: start=0, step=1, limit=4
    $region2: #{tpu_custom_call.1} parent=1 // loop_pre_header
      _
    $region3: #{tpu_custom_call.1} parent=1 // loop_header
      %s14 = sphi 0, %s18
      %p15 = scmp.ge.s32.totalorder %s14, 4
      %s24 = sphi 0, %s26
      %s27 = sphi 0, %s24
      %s28 = sphi 0, %s27
      %s44 = sphi 0, %s28
      %s48 = sphi 0, %s48
      %s50 = sphi 0, %s48
      %s51 = sphi 0, %s50
      %s65 = sphi 0, %s51
      %s69 = sphi 0, %s69
      %s71 = sphi 0, %s69
      %s72 = sphi 0, %s71
      %s86 = sphi 0, %s72
      %s90 = sphi 0, %s90
      %s92 = sphi 0, %s90
      %s93 = sphi 0, %s92
      %s107 = sphi 0, %s93
      %s113 = sphi 0, %s115
      %s116 = sphi 0, %s113
      %s117 = sphi 0, %s116
      %s133 = sphi 0, %s117
    $region4: #{tpu_custom_call.1} parent=1 // loop_header_branch
      %17 = sbr.rel (%p15) target = $region8
    $region5: #{tpu_custom_call.1} parent=1 // loop_body
      %s19 = ssub.s32 %s14, 1
      %s20 = ssub.s32 %s14, 2
      %s21 = sadd.s32 %s14, 1
      %s22 = ssub.s32 %s14, %s21
      %p23 = scmp.eq.s32.totalorder %s22, 0
      %s25 = sadd.s32 %s24, 1
      %s26 = scalar_select %p23, %s24, %s25
      %p29 = pneg %p23
      %p30 = scmp.eq.s32.totalorder %s14, 1
      %p31 = por %p29, %p30
      %p32 = scmp.ne.s32.totalorder %s24, %s27
      %p33 = scmp.eq.s32.totalorder %s14, 0
      %p34 = por %p32, %p33
      %p35 = scmp.ne.s32.totalorder %s24, %s27
      %p36 = scmp.eq.s32.totalorder %s19, 1
      %p37 = por %p35, %p36
      %p38 = scmp.ne.s32.totalorder %s27, %s28
      %p39 = scmp.eq.s32.totalorder %s19, 0
      %p40 = por %p38, %p39
      %p41 = scmp.ne.s32.totalorder %s27, %s28
      %p42 = scmp.eq.s32.totalorder %s20, 1
      %p43 = por %p41, %p42
      %p45 = scmp.ne.s32.totalorder %s28, %s44
      %p46 = scmp.eq.s32.totalorder %s20, 0
      %p47 = por %p45, %p46
      %s49 = sadd.s32 %s48, 1
      %p52 = scmp.eq.s32.totalorder %s14, 1
      %p53 = scmp.ne.s32.totalorder %s48, %s50
      %p54 = scmp.eq.s32.totalorder %s14, 0
      %p55 = por %p53, %p54
      %p56 = scmp.ne.s32.totalorder %s48, %s50
      %p57 = scmp.eq.s32.totalorder %s19, 1
      %p58 = por %p56, %p57
      %p59 = scmp.ne.s32.totalorder %s50, %s51
      %p60 = scmp.eq.s32.totalorder %s19, 0
      %p61 = por %p59, %p60
      %p62 = scmp.ne.s32.totalorder %s50, %s51
      %p63 = scmp.eq.s32.totalorder %s20, 1
      %p64 = por %p62, %p63
      %p66 = scmp.ne.s32.totalorder %s51, %s65
      %p67 = scmp.eq.s32.totalorder %s20, 0
      %p68 = por %p66, %p67
      %s70 = sadd.s32 %s69, 1
      %p73 = scmp.eq.s32.totalorder %s14, 1
      %p74 = scmp.ne.s32.totalorder %s69, %s71
      %p75 = scmp.eq.s32.totalorder %s14, 0
      %p76 = por %p74, %p75
      %p77 = scmp.ne.s32.totalorder %s69, %s71
      %p78 = scmp.eq.s32.totalorder %s19, 1
      %p79 = por %p77, %p78
      %p80 = scmp.ne.s32.totalorder %s71, %s72
      %p81 = scmp.eq.s32.totalorder %s19, 0
      %p82 = por %p80, %p81
      %p83 = scmp.ne.s32.totalorder %s71, %s72
      %p84 = scmp.eq.s32.totalorder %s20, 1
      %p85 = por %p83, %p84
      %p87 = scmp.ne.s32.totalorder %s72, %s86
      %p88 = scmp.eq.s32.totalorder %s20, 0
      %p89 = por %p87, %p88
      %s91 = sadd.s32 %s90, 1
      %p94 = scmp.eq.s32.totalorder %s14, 1
      %p95 = scmp.ne.s32.totalorder %s90, %s92
      %p96 = scmp.eq.s32.totalorder %s14, 0
      %p97 = por %p95, %p96
      %p98 = scmp.ne.s32.totalorder %s90, %s92
      %p99 = scmp.eq.s32.totalorder %s19, 1
      %p100 = por %p98, %p99
      %p101 = scmp.ne.s32.totalorder %s92, %s93
      %p102 = scmp.eq.s32.totalorder %s19, 0
      %p103 = por %p101, %p102
      %p104 = scmp.ne.s32.totalorder %s92, %s93
      %p105 = scmp.eq.s32.totalorder %s20, 1
      %p106 = por %p104, %p105
      %p108 = scmp.ne.s32.totalorder %s93, %s107
      %p109 = scmp.eq.s32.totalorder %s20, 0
      %p110 = por %p108, %p109
      %s111 = ssub.s32 %s14, %s21
      %p112 = scmp.eq.s32.totalorder %s111, 0
      %s114 = sadd.s32 %s113, 1
      %s115 = scalar_select %p112, %s113, %s114
      %p118 = pneg %p112
      %p119 = scmp.eq.s32.totalorder %s14, 1
      %p120 = por %p118, %p119
      %p121 = scmp.ne.s32.totalorder %s113, %s116
      %p122 = scmp.eq.s32.totalorder %s14, 0
      %p123 = por %p121, %p122
      %p124 = scmp.ne.s32.totalorder %s113, %s116
      %p125 = scmp.eq.s32.totalorder %s19, 1
      %p126 = por %p124, %p125
      %p127 = scmp.ne.s32.totalorder %s116, %s117
      %p128 = scmp.eq.s32.totalorder %s19, 0
      %p129 = por %p127, %p128
      %p130 = scmp.ne.s32.totalorder %s116, %s117
      %p131 = scmp.eq.s32.totalorder %s20, 1
      %p132 = por %p130, %p131
      %p134 = scmp.ne.s32.totalorder %s117, %s133
      %p135 = scmp.eq.s32.totalorder %s20, 0
      %p136 = por %p134, %p135
      %p137 = scmp.le.s32.totalorder 1, %s14
      %p138 = scmp.lt.s32.totalorder %s14, 3
      %p139 = pnand %p137, %p138
      %p140 = pneg %p139
      // Predicated region
      $region9: #{tpu_custom_call.1} parent=5 // pred_check
        _
      $region10: #{tpu_custom_call.1} parent=5 // pred_check_branch
        %142 = sbr.rel (%p139) target = $region12
      $region11: #{tpu_custom_call.1} parent=5 // pred_region
        %s143 = ssub.s32 %s14, 1
        // Predicated region
        $region13: #{tpu_custom_call.1} parent=11 // pred_check
          %p144 = pneg %p61
        $region14: #{tpu_custom_call.1} parent=11 // pred_check_branch
          %146 = sbr.rel (%p144) target = $region16
        $region15: #{tpu_custom_call.1} parent=11 // pred_region
          %s148 = ssub.s32 512, 512
          %149 = vsyncadd [#allocation3], %s148
          %s150 = sshll.u32 [#allocation2], 4
          %s151 = int_to_ptr.vmem [resolvable:$true] %s150
          %156 = dma.hbm_to_vmem [thread:$0]  %s1, 512, %s151, [#allocation3], 128, 128, 8
        $region16: #{tpu_custom_call.1} parent=11 // pred_fallthru
          _
        // Predicated region
        $region17: #{tpu_custom_call.1} parent=11 // pred_check
          %p157 = pneg %p82
        $region18: #{tpu_custom_call.1} parent=11 // pred_check_branch
          %159 = sbr.rel (%p157) target = $region20
        $region19: #{tpu_custom_call.1} parent=11 // pred_region
          _
        $region20: #{tpu_custom_call.1} parent=11 // pred_fallthru
          _
        // Predicated region
        $region21: #{tpu_custom_call.1} parent=11 // pred_check
          %p160 = pneg %p103
        $region22: #{tpu_custom_call.1} parent=11 // pred_check_branch
          %162 = sbr.rel (%p160) target = $region24
        $region23: #{tpu_custom_call.1} parent=11 // pred_region
          _
        $region24: #{tpu_custom_call.1} parent=11 // pred_fallthru
          _
      $region12: #{tpu_custom_call.1} parent=5 // pred_fallthru
        _
      %p163 = scmp.lt.s32.totalorder %s14, 2
      // Predicated region
      $region25: #{tpu_custom_call.1} parent=5 // pred_check
        %p164 = pneg %p163
      $region26: #{tpu_custom_call.1} parent=5 // pred_check_branch
        %166 = sbr.rel (%p164) target = $region28
      $region27: #{tpu_custom_call.1} parent=5 // pred_region
        // Predicated region
        $region29: #{tpu_custom_call.1} parent=27 // pred_check
          %p167 = pneg %p34
        $region30: #{tpu_custom_call.1} parent=27 // pred_check_branch
          %169 = sbr.rel (%p167) target = $region32
        $region31: #{tpu_custom_call.1} parent=27 // pred_region
          %p170 = scmp.lt.s32.totalorder %s14, 1
          %s171 = scalar_select %p170, %s14, 1
          %s172 = smul.addr %s171, 4
          %s173 = smul.addr %s172, 4
          %s174 = scalar_lea.vmem %s0, %s173
        $region32: #{tpu_custom_call.1} parent=27 // pred_fallthru
          _
      $region28: #{tpu_custom_call.1} parent=5 // pred_fallthru
        _
      %p175 = scmp.le.s32.totalorder 1, %s14
      %p176 = scmp.lt.s32.totalorder %s14, 3
      %p177 = pnand %p175, %p176
      %p178 = pneg %p177
      // Predicated region
      $region33: #{tpu_custom_call.1} parent=5 // pred_check
        _
      $region34: #{tpu_custom_call.1} parent=5 // pred_check_branch
        %180 = sbr.rel (%p177) target = $region36
      $region35: #{tpu_custom_call.1} parent=5 // pred_region
        %s181 = ssub.s32 %s14, 1
        // Predicated region
        $region37: #{tpu_custom_call.1} parent=35 // pred_check
          %p182 = pneg %p61
        $region38: #{tpu_custom_call.1} parent=35 // pred_check_branch
          %184 = sbr.rel (%p182) target = $region40
        $region39: #{tpu_custom_call.1} parent=35 // pred_region
          %185 = dma.done [#allocation3], 512
        $region40: #{tpu_custom_call.1} parent=35 // pred_fallthru
          _
        %p186 = scmp.lt.s32.totalorder %s19, 1
        %s187 = scalar_select %p186, %s19, 1
        %s188 = smul.addr %s187, 4
        %s189 = smul.addr %s188, 4
        %s190 = scalar_lea.vmem %s0, %s189
        %p191 = pneg %p40
        %p192 = pneg %p37
        %p193 = pneg %p61
        %p194 = pneg %p58
        %p195 = pneg %p82
        %p196 = pneg %p79
        %p197 = pneg %p103
        %p198 = pneg %p100
        %p199 = pneg %p129
        %p200 = pneg %p126
        %s201 = sand.u32 %s116, 1
        %s202 = scalar_lea.sflag [#allocation4], %s201
        %s203 = sand.u32 %s116, 1
        %s204 = smul.addr %s203, 96
        %s205 = scalar_lea.vmem [#allocation5], %s204
        %p206 = scmp.lt.s32.totalorder %s19, 1
        %s207 = scalar_select %p206, %s19, 1
        %s208 = smul.addr %s207, 4
        %s209 = smul.addr %s208, 4
        %s210 = scalar_lea.vmem %s0, %s209
        %v211 = vld [vmem:[%s210] sm:$0xff]
        %v212 = vld [vmem:[%s210 + $0x8] sm:$0xff]
        %v213 = vld [vmem:[%s2] sm:$0x7]
        %v214 = vld [vmem:[#allocation2] sm:$0xff]
        %216 = vset.pattern.permute.xlu0 0
        %217 = vperm.xlu0 %216, %v214
        %v218 = vpop.permute.xlu0 %217
        %v222 = vlaneseq
        %v223 = vshrl.u32 %v222, 7
        %v224 = vsub.s32 0, %v223
        %v225 = vrot.slane %v211, %v224
        %v226 = vlaneseq
        %v227 = vshrl.u32 %v226, 7
        %v228 = vsub.s32 4, %v227
        %v229 = vrot.slane %v211, %v228
        %v230 = vlaneseq
        %v231 = vshrl.u32 %v230, 7
        %v232 = vsub.s32 0, %v231
        %v233 = vrot.slane %v212, %v232
        %v237 = vlaneseq
        %v238 = vshrl.u32 %v237, 7
        %v239 = vsub.s32 0, %v238
        %v240 = vrot.slane %v225, %v239
        %v241 = vlaneseq
        %v242 = vshrl.u32 %v241, 7
        %v243 = vsub.s32 0, %v242
        %v244 = vrot.slane %v229, %v243
        %v245 = vlaneseq
        %v246 = vshrl.u32 %v245, 7
        %v247 = vsub.s32 0, %v246
        %v248 = vrot.slane %v233, %v247
        %v249 = vmul.f32 %v218, %v240
        %v250 = vmul.f32 %v218, %v244
        %v251 = vmul.f32 %v218, %v248
        %v252 = vadd.f32 %v249, 0.0
        %v253 = vadd.f32 %v250, 0.0
        %v254 = vadd.f32 %v251, 0.0
        %255 = vset.pattern.permute.xlu0 1
        %256 = vperm.xlu0 %255, %v214
        %v257 = vpop.permute.xlu0 %256
        %v259 = vlaneseq
        %v260 = vshrl.u32 %v259, 7
        %v261 = vsub.s32 1, %v260
        %v262 = vrot.slane %v211, %v261
        %v263 = vlaneseq
        %v264 = vshrl.u32 %v263, 7
        %v265 = vsub.s32 5, %v264
        %v266 = vrot.slane %v211, %v265
        %v267 = vlaneseq
        %v268 = vshrl.u32 %v267, 7
        %v269 = vsub.s32 1, %v268
        %v270 = vrot.slane %v212, %v269
        %v274 = vlaneseq
        %v275 = vshrl.u32 %v274, 7
        %v276 = vsub.s32 1, %v275
        %v277 = vrot.slane %v262, %v276
        %v278 = vlaneseq
        %v279 = vshrl.u32 %v278, 7
        %v280 = vsub.s32 1, %v279
        %v281 = vrot.slane %v266, %v280
        %v282 = vlaneseq
        %v283 = vshrl.u32 %v282, 7
        %v284 = vsub.s32 1, %v283
        %v285 = vrot.slane %v270, %v284
        %v286 = vmul.f32 %v257, %v277
        %v287 = vmul.f32 %v257, %v281
        %v288 = vmul.f32 %v257, %v285
        %v289 = vadd.f32 %v286, 0.0
        %v290 = vadd.f32 %v287, 0.0
        %v291 = vadd.f32 %v288, 0.0
        %292 = vset.pattern.permute.xlu0 2
        %293 = vperm.xlu0 %292, %v214
        %v294 = vpop.permute.xlu0 %293
        %v296 = vlaneseq
        %v297 = vshrl.u32 %v296, 7
        %v298 = vsub.s32 2, %v297
        %v299 = vrot.slane %v211, %v298
        %v300 = vlaneseq
        %v301 = vshrl.u32 %v300, 7
        %v302 = vsub.s32 6, %v301
        %v303 = vrot.slane %v211, %v302
        %v304 = vlaneseq
        %v305 = vshrl.u32 %v304, 7
        %v306 = vsub.s32 2, %v305
        %v307 = vrot.slane %v212, %v306
        %v311 = vlaneseq
        %v312 = vshrl.u32 %v311, 7
        %v313 = vsub.s32 2, %v312
        %v314 = vrot.slane %v299, %v313
        %v315 = vlaneseq
        %v316 = vshrl.u32 %v315, 7
        %v317 = vsub.s32 2, %v316
        %v318 = vrot.slane %v303, %v317
        %v319 = vlaneseq
        %v320 = vshrl.u32 %v319, 7
        %v321 = vsub.s32 2, %v320
        %v322 = vrot.slane %v307, %v321
        %v323 = vmul.f32 %v294, %v314
        %v324 = vmul.f32 %v294, %v318
        %v325 = vmul.f32 %v294, %v322
        %v326 = vadd.f32 %v252, %v323
        %v327 = vadd.f32 %v253, %v324
        %v328 = vadd.f32 %v254, %v325
        %329 = vset.pattern.permute.xlu0 3
        %330 = vperm.xlu0 %329, %v214
        %v331 = vpop.permute.xlu0 %330
        %v333 = vlaneseq
        %v334 = vshrl.u32 %v333, 7
        %v335 = vsub.s32 3, %v334
        %v336 = vrot.slane %v211, %v335
        %v337 = vlaneseq
        %v338 = vshrl.u32 %v337, 7
        %v339 = vsub.s32 7, %v338
        %v340 = vrot.slane %v211, %v339
        %v341 = vlaneseq
        %v342 = vshrl.u32 %v341, 7
        %v343 = vsub.s32 3, %v342
        %v344 = vrot.slane %v212, %v343
        %v348 = vlaneseq
        %v349 = vshrl.u32 %v348, 7
        %v350 = vsub.s32 3, %v349
        %v351 = vrot.slane %v336, %v350
        %v352 = vlaneseq
        %v353 = vshrl.u32 %v352, 7
        %v354 = vsub.s32 3, %v353
        %v355 = vrot.slane %v340, %v354
        %v356 = vlaneseq
        %v357 = vshrl.u32 %v356, 7
        %v358 = vsub.s32 3, %v357
        %v359 = vrot.slane %v344, %v358
        %v360 = vmul.f32 %v331, %v351
        %v361 = vmul.f32 %v331, %v355
        %v362 = vmul.f32 %v331, %v359
        %v363 = vadd.f32 %v289, %v360
        %v364 = vadd.f32 %v290, %v361
        %v365 = vadd.f32 %v291, %v362
        %366 = vset.pattern.permute.xlu0 4
        %367 = vperm.xlu0 %366, %v214
        %v368 = vpop.permute.xlu0 %367
        %v370 = vlaneseq
        %v371 = vshrl.u32 %v370, 7
        %v372 = vsub.s32 4, %v371
        %v373 = vrot.slane %v212, %v372
        %v375 = vlaneseq
        %v376 = vshrl.u32 %v375, 7
        %v377 = vsub.s32 0, %v376
        %v378 = vrot.slane %v373, %v377
        %v379 = vmul.f32 %v368, %v240
        %v380 = vmul.f32 %v368, %v244
        %v381 = vmul.f32 %v368, %v248
        %v382 = vmul.f32 %v368, %v378
        %387 = vrot.lane.b32.xlu0 %v379, 127
        %v388 = vpop.permute.xlu0 %387
        %389 = vrot.lane.b32.xlu0 %v380, 127
        %v390 = vpop.permute.xlu0 %389
        %391 = vrot.lane.b32.xlu0 %v381, 127
        %v392 = vpop.permute.xlu0 %391
        %393 = vrot.lane.b32.xlu0 %v382, 127
        %v394 = vpop.permute.xlu0 %393
        %vm395 = vcmask 1039360
        %v396 = vsel %vm395, %v388, %v390
        %v397 = vsel %vm395, %v390, %v392
        %v398 = vsel %vm395, %v392, %v394
        %v402 = vadd.f32 %v326, %v396
        %v403 = vadd.f32 %v327, %v397
        %v404 = vadd.f32 %v328, %v398
        %405 = vset.pattern.permute.xlu0 5
        %406 = vperm.xlu0 %405, %v214
        %v407 = vpop.permute.xlu0 %406
        %v409 = vlaneseq
        %v410 = vshrl.u32 %v409, 7
        %v411 = vsub.s32 5, %v410
        %v412 = vrot.slane %v212, %v411
        %v414 = vlaneseq
        %v415 = vshrl.u32 %v414, 7
        %v416 = vsub.s32 1, %v415
        %v417 = vrot.slane %v412, %v416
        %v418 = vmul.f32 %v407, %v277
        %v419 = vmul.f32 %v407, %v281
        %v420 = vmul.f32 %v407, %v285
        %v421 = vmul.f32 %v407, %v417
        %426 = vrot.lane.b32.xlu0 %v418, 127
        %v427 = vpop.permute.xlu0 %426
        %428 = vrot.lane.b32.xlu0 %v419, 127
        %v429 = vpop.permute.xlu0 %428
        %430 = vrot.lane.b32.xlu0 %v420, 127
        %v431 = vpop.permute.xlu0 %430
        %432 = vrot.lane.b32.xlu0 %v421, 127
        %v433 = vpop.permute.xlu0 %432
        %v434 = vsel %vm395, %v427, %v429
        %v435 = vsel %vm395, %v429, %v431
        %v436 = vsel %vm395, %v431, %v433
        %v440 = vadd.f32 %v363, %v434
        %v441 = vadd.f32 %v364, %v435
        %v442 = vadd.f32 %v365, %v436
        %443 = vset.pattern.permute.xlu0 6
        %444 = vperm.xlu0 %443, %v214
        %v445 = vpop.permute.xlu0 %444
        %v447 = vlaneseq
        %v448 = vshrl.u32 %v447, 7
        %v449 = vsub.s32 6, %v448
        %v450 = vrot.slane %v212, %v449
        %v452 = vlaneseq
        %v453 = vshrl.u32 %v452, 7
        %v454 = vsub.s32 2, %v453
        %v455 = vrot.slane %v450, %v454
        %v456 = vmul.f32 %v445, %v314
        %v457 = vmul.f32 %v445, %v318
        %v458 = vmul.f32 %v445, %v322
        %v459 = vmul.f32 %v445, %v455
        %464 = vrot.lane.b32.xlu0 %v456, 127
        %v465 = vpop.permute.xlu0 %464
        %466 = vrot.lane.b32.xlu0 %v457, 127
        %v467 = vpop.permute.xlu0 %466
        %468 = vrot.lane.b32.xlu0 %v458, 127
        %v469 = vpop.permute.xlu0 %468
        %470 = vrot.lane.b32.xlu0 %v459, 127
        %v471 = vpop.permute.xlu0 %470
        %v472 = vsel %vm395, %v465, %v467
        %v473 = vsel %vm395, %v467, %v469
        %v474 = vsel %vm395, %v469, %v471
        %v478 = vadd.f32 %v402, %v472
        %v479 = vadd.f32 %v403, %v473
        %v480 = vadd.f32 %v404, %v474
        %481 = vset.pattern.permute.xlu0 7
        %482 = vperm.xlu0 %481, %v214
        %v483 = vpop.permute.xlu0 %482
        %v485 = vlaneseq
        %v486 = vshrl.u32 %v485, 7
        %v487 = vsub.s32 7, %v486
        %v488 = vrot.slane %v212, %v487
        %v490 = vlaneseq
        %v491 = vshrl.u32 %v490, 7
        %v492 = vsub.s32 3, %v491
        %v493 = vrot.slane %v488, %v492
        %v494 = vmul.f32 %v483, %v351
        %v495 = vmul.f32 %v483, %v355
        %v496 = vmul.f32 %v483, %v359
        %v497 = vmul.f32 %v483, %v493
        %502 = vrot.lane.b32.xlu0 %v494, 127
        %v503 = vpop.permute.xlu0 %502
        %504 = vrot.lane.b32.xlu0 %v495, 127
        %v505 = vpop.permute.xlu0 %504
        %506 = vrot.lane.b32.xlu0 %v496, 127
        %v507 = vpop.permute.xlu0 %506
        %508 = vrot.lane.b32.xlu0 %v497, 127
        %v509 = vpop.permute.xlu0 %508
        %v510 = vsel %vm395, %v503, %v505
        %v511 = vsel %vm395, %v505, %v507
        %v512 = vsel %vm395, %v507, %v509
        %v516 = vadd.f32 %v440, %v510
        %v517 = vadd.f32 %v441, %v511
        %v518 = vadd.f32 %v442, %v512
        %519 = vset.pattern.permute.xlu0 8
        %520 = vperm.xlu0 %519, %v214
        %v521 = vpop.permute.xlu0 %520
        %v523 = vmul.f32 %v521, %v240
        %v524 = vmul.f32 %v521, %v244
        %v525 = vmul.f32 %v521, %v248
        %v526 = vmul.f32 %v521, %v378
        %531 = vrot.lane.b32.xlu0 %v523, 110
        %v532 = vpop.permute.xlu0 %531
        %533 = vrot.lane.b32.xlu0 %v524, 110
        %v534 = vpop.permute.xlu0 %533
        %535 = vrot.lane.b32.xlu0 %v525, 110
        %v536 = vpop.permute.xlu0 %535
        %537 = vrot.lane.b32.xlu0 %v526, 110
        %v538 = vpop.permute.xlu0 %537
        %vm539 = vcmask 900096
        %v540 = vsel %vm539, %v532, %v534
        %v541 = vsel %vm539, %v534, %v536
        %v542 = vsel %vm539, %v536, %v538
        %v546 = vadd.f32 %v478, %v540
        %v547 = vadd.f32 %v479, %v541
        %v548 = vadd.f32 %v480, %v542
        %549 = vset.pattern.permute.xlu0 9
        %550 = vperm.xlu0 %549, %v214
        %v551 = vpop.permute.xlu0 %550
        %v553 = vmul.f32 %v551, %v277
        %v554 = vmul.f32 %v551, %v281
        %v555 = vmul.f32 %v551, %v285
        %v556 = vmul.f32 %v551, %v417
        %561 = vrot.lane.b32.xlu0 %v553, 110
        %v562 = vpop.permute.xlu0 %561
        %563 = vrot.lane.b32.xlu0 %v554, 110
        %v564 = vpop.permute.xlu0 %563
        %565 = vrot.lane.b32.xlu0 %v555, 110
        %v566 = vpop.permute.xlu0 %565
        %567 = vrot.lane.b32.xlu0 %v556, 110
        %v568 = vpop.permute.xlu0 %567
        %v569 = vsel %vm539, %v562, %v564
        %v570 = vsel %vm539, %v564, %v566
        %v571 = vsel %vm539, %v566, %v568
        %v575 = vadd.f32 %v516, %v569
        %v576 = vadd.f32 %v517, %v570
        %v577 = vadd.f32 %v518, %v571
        %578 = vset.pattern.permute.xlu0 10
        %579 = vperm.xlu0 %578, %v214
        %v580 = vpop.permute.xlu0 %579
        %v582 = vmul.f32 %v580, %v314
        %v583 = vmul.f32 %v580, %v318
        %v584 = vmul.f32 %v580, %v322
        %v585 = vmul.f32 %v580, %v455
        %590 = vrot.lane.b32.xlu0 %v582, 110
        %v591 = vpop.permute.xlu0 %590
        %592 = vrot.lane.b32.xlu0 %v583, 110
        %v593 = vpop.permute.xlu0 %592
        %594 = vrot.lane.b32.xlu0 %v584, 110
        %v595 = vpop.permute.xlu0 %594
        %596 = vrot.lane.b32.xlu0 %v585, 110
        %v597 = vpop.permute.xlu0 %596
        %v598 = vsel %vm539, %v591, %v593
        %v599 = vsel %vm539, %v593, %v595
        %v600 = vsel %vm539, %v595, %v597
        %v604 = vadd.f32 %v546, %v598
        %v605 = vadd.f32 %v547, %v599
        %v606 = vadd.f32 %v548, %v600
        %607 = vset.pattern.permute.xlu0 11
        %608 = vperm.xlu0 %607, %v214
        %v609 = vpop.permute.xlu0 %608
        %v611 = vmul.f32 %v609, %v351
        %v612 = vmul.f32 %v609, %v355
        %v613 = vmul.f32 %v609, %v359
        %v614 = vmul.f32 %v609, %v493
        %619 = vrot.lane.b32.xlu0 %v611, 110
        %v620 = vpop.permute.xlu0 %619
        %621 = vrot.lane.b32.xlu0 %v612, 110
        %v622 = vpop.permute.xlu0 %621
        %623 = vrot.lane.b32.xlu0 %v613, 110
        %v624 = vpop.permute.xlu0 %623
        %625 = vrot.lane.b32.xlu0 %v614, 110
        %v626 = vpop.permute.xlu0 %625
        %v627 = vsel %vm539, %v620, %v622
        %v628 = vsel %vm539, %v622, %v624
        %v629 = vsel %vm539, %v624, %v626
        %v633 = vadd.f32 %v575, %v627
        %v634 = vadd.f32 %v576, %v628
        %v635 = vadd.f32 %v577, %v629
        %636 = vset.pattern.permute.xlu0 12
        %637 = vperm.xlu0 %636, %v214
        %v638 = vpop.permute.xlu0 %637
        %v640 = vmul.f32 %v638, %v240
        %v641 = vmul.f32 %v638, %v244
        %v642 = vmul.f32 %v638, %v248
        %v643 = vmul.f32 %v638, %v378
        %648 = vrot.lane.b32.xlu0 %v640, 109
        %v649 = vpop.permute.xlu0 %648
        %650 = vrot.lane.b32.xlu0 %v641, 109
        %v651 = vpop.permute.xlu0 %650
        %652 = vrot.lane.b32.xlu0 %v642, 109
        %v653 = vpop.permute.xlu0 %652
        %654 = vrot.lane.b32.xlu0 %v643, 109
        %v655 = vpop.permute.xlu0 %654
        %vm656 = vcmask 891904
        %v657 = vsel %vm656, %v649, %v651
        %v658 = vsel %vm656, %v651, %v653
        %v659 = vsel %vm656, %v653, %v655
        %v663 = vadd.f32 %v604, %v657
        %v664 = vadd.f32 %v605, %v658
        %v665 = vadd.f32 %v606, %v659
        %666 = vset.pattern.permute.xlu0 13
        %667 = vperm.xlu0 %666, %v214
        %v668 = vpop.permute.xlu0 %667
        %v670 = vmul.f32 %v668, %v277
        %v671 = vmul.f32 %v668, %v281
        %v672 = vmul.f32 %v668, %v285
        %v673 = vmul.f32 %v668, %v417
        %678 = vrot.lane.b32.xlu0 %v670, 109
        %v679 = vpop.permute.xlu0 %678
        %680 = vrot.lane.b32.xlu0 %v671, 109
        %v681 = vpop.permute.xlu0 %680
        %682 = vrot.lane.b32.xlu0 %v672, 109
        %v683 = vpop.permute.xlu0 %682
        %684 = vrot.lane.b32.xlu0 %v673, 109
        %v685 = vpop.permute.xlu0 %684
        %v686 = vsel %vm656, %v679, %v681
        %v687 = vsel %vm656, %v681, %v683
        %v688 = vsel %vm656, %v683, %v685
        %v692 = vadd.f32 %v633, %v686
        %v693 = vadd.f32 %v634, %v687
        %v694 = vadd.f32 %v635, %v688
        %695 = vset.pattern.permute.xlu0 14
        %696 = vperm.xlu0 %695, %v214
        %v697 = vpop.permute.xlu0 %696
        %v699 = vmul.f32 %v697, %v314
        %v700 = vmul.f32 %v697, %v318
        %v701 = vmul.f32 %v697, %v322
        %v702 = vmul.f32 %v697, %v455
        %707 = vrot.lane.b32.xlu0 %v699, 109
        %v708 = vpop.permute.xlu0 %707
        %709 = vrot.lane.b32.xlu0 %v700, 109
        %v710 = vpop.permute.xlu0 %709
        %711 = vrot.lane.b32.xlu0 %v701, 109
        %v712 = vpop.permute.xlu0 %711
        %713 = vrot.lane.b32.xlu0 %v702, 109
        %v714 = vpop.permute.xlu0 %713
        %v715 = vsel %vm656, %v708, %v710
        %v716 = vsel %vm656, %v710, %v712
        %v717 = vsel %vm656, %v712, %v714
        %v721 = vadd.f32 %v663, %v715
        %v722 = vadd.f32 %v664, %v716
        %v723 = vadd.f32 %v665, %v717
        %724 = vset.pattern.permute.xlu0 15
        %725 = vperm.xlu0 %724, %v214
        %v726 = vpop.permute.xlu0 %725
        %v728 = vmul.f32 %v726, %v351
        %v729 = vmul.f32 %v726, %v355
        %v730 = vmul.f32 %v726, %v359
        %v731 = vmul.f32 %v726, %v493
        %736 = vrot.lane.b32.xlu0 %v728, 109
        %v737 = vpop.permute.xlu0 %736
        %738 = vrot.lane.b32.xlu0 %v729, 109
        %v739 = vpop.permute.xlu0 %738
        %740 = vrot.lane.b32.xlu0 %v730, 109
        %v741 = vpop.permute.xlu0 %740
        %742 = vrot.lane.b32.xlu0 %v731, 109
        %v743 = vpop.permute.xlu0 %742
        %v744 = vsel %vm656, %v737, %v739
        %v745 = vsel %vm656, %v739, %v741
        %v746 = vsel %vm656, %v741, %v743
        %v750 = vadd.f32 %v692, %v744
        %v751 = vadd.f32 %v693, %v745
        %v752 = vadd.f32 %v694, %v746
        %v753 = vadd.f32 %v721, %v750
        %v754 = vadd.f32 %v722, %v751
        %v755 = vadd.f32 %v723, %v752
        %s756 = scalar_lea.vmem [#allocation2], 8
        %v757 = vld [vmem:[%s756] sm:$0xff]
        %759 = vset.pattern.permute.xlu0 0
        %760 = vperm.xlu0 %759, %v757
        %v761 = vpop.permute.xlu0 %760
        %v763 = vmul.f32 %v761, %v240
        %v764 = vmul.f32 %v761, %v244
        %v765 = vmul.f32 %v761, %v248
        %v766 = vmul.f32 %v761, %v378
        %v767 = vadd.f32 %v763, 0.0
        %v768 = vadd.f32 %v764, 0.0
        %v769 = vadd.f32 %v765, 0.0
        %v770 = vadd.f32 %v766, 0.0
        %771 = vset.pattern.permute.xlu0 1
        %772 = vperm.xlu0 %771, %v757
        %v773 = vpop.permute.xlu0 %772
        %v775 = vmul.f32 %v773, %v277
        %v776 = vmul.f32 %v773, %v281
        %v777 = vmul.f32 %v773, %v285
        %v778 = vmul.f32 %v773, %v417
        %v779 = vadd.f32 %v775, 0.0
        %v780 = vadd.f32 %v776, 0.0
        %v781 = vadd.f32 %v777, 0.0
        %v782 = vadd.f32 %v778, 0.0
        %783 = vset.pattern.permute.xlu0 2
        %784 = vperm.xlu0 %783, %v757
        %v785 = vpop.permute.xlu0 %784
        %v787 = vmul.f32 %v785, %v314
        %v788 = vmul.f32 %v785, %v318
        %v789 = vmul.f32 %v785, %v322
        %v790 = vmul.f32 %v785, %v455
        %v791 = vadd.f32 %v767, %v787
        %v792 = vadd.f32 %v768, %v788
        %v793 = vadd.f32 %v769, %v789
        %v794 = vadd.f32 %v770, %v790
        %795 = vset.pattern.permute.xlu0 3
        %796 = vperm.xlu0 %795, %v757
        %v797 = vpop.permute.xlu0 %796
        %v799 = vmul.f32 %v797, %v351
        %v800 = vmul.f32 %v797, %v355
        %v801 = vmul.f32 %v797, %v359
        %v802 = vmul.f32 %v797, %v493
        %v803 = vadd.f32 %v779, %v799
        %v804 = vadd.f32 %v780, %v800
        %v805 = vadd.f32 %v781, %v801
        %v806 = vadd.f32 %v782, %v802
        %807 = vset.pattern.permute.xlu0 4
        %808 = vperm.xlu0 %807, %v757
        %v809 = vpop.permute.xlu0 %808
        %v811 = vmul.f32 %v809, %v240
        %v812 = vmul.f32 %v809, %v244
        %v813 = vmul.f32 %v809, %v248
        %v814 = vmul.f32 %v809, %v378
        %819 = vrot.lane.b32.xlu0 %v811, 127
        %v820 = vpop.permute.xlu0 %819
        %821 = vrot.lane.b32.xlu0 %v812, 127
        %v822 = vpop.permute.xlu0 %821
        %823 = vrot.lane.b32.xlu0 %v813, 127
        %v824 = vpop.permute.xlu0 %823
        %825 = vrot.lane.b32.xlu0 %v814, 127
        %v826 = vpop.permute.xlu0 %825
        %v827 = vsel %vm395, %v820, %v822
        %v828 = vsel %vm395, %v822, %v824
        %v829 = vsel %vm395, %v824, %v826
        %v834 = vadd.f32 %v791, %v827
        %v835 = vadd.f32 %v792, %v828
        %v836 = vadd.f32 %v793, %v829
        %v837 = vadd.f32 %v794, %v826
        %838 = vset.pattern.permute.xlu0 5
        %839 = vperm.xlu0 %838, %v757
        %v840 = vpop.permute.xlu0 %839
        %v842 = vmul.f32 %v840, %v277
        %v843 = vmul.f32 %v840, %v281
        %v844 = vmul.f32 %v840, %v285
        %v845 = vmul.f32 %v840, %v417
        %850 = vrot.lane.b32.xlu0 %v842, 127
        %v851 = vpop.permute.xlu0 %850
        %852 = vrot.lane.b32.xlu0 %v843, 127
        %v853 = vpop.permute.xlu0 %852
        %854 = vrot.lane.b32.xlu0 %v844, 127
        %v855 = vpop.permute.xlu0 %854
        %856 = vrot.lane.b32.xlu0 %v845, 127
        %v857 = vpop.permute.xlu0 %856
        %v858 = vsel %vm395, %v851, %v853
        %v859 = vsel %vm395, %v853, %v855
        %v860 = vsel %vm395, %v855, %v857
        %v865 = vadd.f32 %v803, %v858
        %v866 = vadd.f32 %v804, %v859
        %v867 = vadd.f32 %v805, %v860
        %v868 = vadd.f32 %v806, %v857
        %869 = vset.pattern.permute.xlu0 6
        %870 = vperm.xlu0 %869, %v757
        %v871 = vpop.permute.xlu0 %870
        %v873 = vmul.f32 %v871, %v314
        %v874 = vmul.f32 %v871, %v318
        %v875 = vmul.f32 %v871, %v322
        %v876 = vmul.f32 %v871, %v455
        %881 = vrot.lane.b32.xlu0 %v873, 127
        %v882 = vpop.permute.xlu0 %881
        %883 = vrot.lane.b32.xlu0 %v874, 127
        %v884 = vpop.permute.xlu0 %883
        %885 = vrot.lane.b32.xlu0 %v875, 127
        %v886 = vpop.permute.xlu0 %885
        %887 = vrot.lane.b32.xlu0 %v876, 127
        %v888 = vpop.permute.xlu0 %887
        %v889 = vsel %vm395, %v882, %v884
        %v890 = vsel %vm395, %v884, %v886
        %v891 = vsel %vm395, %v886, %v888
        %v896 = vadd.f32 %v834, %v889
        %v897 = vadd.f32 %v835, %v890
        %v898 = vadd.f32 %v836, %v891
        %v899 = vadd.f32 %v837, %v888
        %900 = vset.pattern.permute.xlu0 7
        %901 = vperm.xlu0 %900, %v757
        %v902 = vpop.permute.xlu0 %901
        %v904 = vmul.f32 %v902, %v351
        %v905 = vmul.f32 %v902, %v355
        %v906 = vmul.f32 %v902, %v359
        %v907 = vmul.f32 %v902, %v493
        %912 = vrot.lane.b32.xlu0 %v904, 127
        %v913 = vpop.permute.xlu0 %912
        %914 = vrot.lane.b32.xlu0 %v905, 127
        %v915 = vpop.permute.xlu0 %914
        %916 = vrot.lane.b32.xlu0 %v906, 127
        %v917 = vpop.permute.xlu0 %916
        %918 = vrot.lane.b32.xlu0 %v907, 127
        %v919 = vpop.permute.xlu0 %918
        %v920 = vsel %vm395, %v913, %v915
        %v921 = vsel %vm395, %v915, %v917
        %v922 = vsel %vm395, %v917, %v919
        %v927 = vadd.f32 %v865, %v920
        %v928 = vadd.f32 %v866, %v921
        %v929 = vadd.f32 %v867, %v922
        %v930 = vadd.f32 %v868, %v919
        %931 = vset.pattern.permute.xlu0 8
        %932 = vperm.xlu0 %931, %v757
        %v933 = vpop.permute.xlu0 %932
        %v935 = vmul.f32 %v933, %v240
        %v936 = vmul.f32 %v933, %v244
        %v937 = vmul.f32 %v933, %v248
        %v938 = vmul.f32 %v933, %v378
        %943 = vrot.lane.b32.xlu0 %v935, 110
        %v944 = vpop.permute.xlu0 %943
        %945 = vrot.lane.b32.xlu0 %v936, 110
        %v946 = vpop.permute.xlu0 %945
        %947 = vrot.lane.b32.xlu0 %v937, 110
        %v948 = vpop.permute.xlu0 %947
        %949 = vrot.lane.b32.xlu0 %v938, 110
        %v950 = vpop.permute.xlu0 %949
        %v951 = vsel %vm539, %v944, %v946
        %v952 = vsel %vm539, %v946, %v948
        %v953 = vsel %vm539, %v948, %v950
        %v958 = vadd.f32 %v896, %v951
        %v959 = vadd.f32 %v897, %v952
        %v960 = vadd.f32 %v898, %v953
        %v961 = vadd.f32 %v899, %v950
        %962 = vset.pattern.permute.xlu0 9
        %963 = vperm.xlu0 %962, %v757
        %v964 = vpop.permute.xlu0 %963
        %v966 = vmul.f32 %v964, %v277
        %v967 = vmul.f32 %v964, %v281
        %v968 = vmul.f32 %v964, %v285
        %v969 = vmul.f32 %v964, %v417
        %974 = vrot.lane.b32.xlu0 %v966, 110
        %v975 = vpop.permute.xlu0 %974
        %976 = vrot.lane.b32.xlu0 %v967, 110
        %v977 = vpop.permute.xlu0 %976
        %978 = vrot.lane.b32.xlu0 %v968, 110
        %v979 = vpop.permute.xlu0 %978
        %980 = vrot.lane.b32.xlu0 %v969, 110
        %v981 = vpop.permute.xlu0 %980
        %v982 = vsel %vm539, %v975, %v977
        %v983 = vsel %vm539, %v977, %v979
        %v984 = vsel %vm539, %v979, %v981
        %v989 = vadd.f32 %v927, %v982
        %v990 = vadd.f32 %v928, %v983
        %v991 = vadd.f32 %v929, %v984
        %v992 = vadd.f32 %v930, %v981
        %993 = vset.pattern.permute.xlu0 10
        %994 = vperm.xlu0 %993, %v757
        %v995 = vpop.permute.xlu0 %994
        %v997 = vmul.f32 %v995, %v314
        %v998 = vmul.f32 %v995, %v318
        %v999 = vmul.f32 %v995, %v322
        %v1000 = vmul.f32 %v995, %v455
        %1005 = vrot.lane.b32.xlu0 %v997, 110
        %v1006 = vpop.permute.xlu0 %1005
        %1007 = vrot.lane.b32.xlu0 %v998, 110
        %v1008 = vpop.permute.xlu0 %1007
        %1009 = vrot.lane.b32.xlu0 %v999, 110
        %v1010 = vpop.permute.xlu0 %1009
        %1011 = vrot.lane.b32.xlu0 %v1000, 110
        %v1012 = vpop.permute.xlu0 %1011
        %v1013 = vsel %vm539, %v1006, %v1008
        %v1014 = vsel %vm539, %v1008, %v1010
        %v1015 = vsel %vm539, %v1010, %v1012
        %v1020 = vadd.f32 %v958, %v1013
        %v1021 = vadd.f32 %v959, %v1014
        %v1022 = vadd.f32 %v960, %v1015
        %v1023 = vadd.f32 %v961, %v1012
        %1024 = vset.pattern.permute.xlu0 11
        %1025 = vperm.xlu0 %1024, %v757
        %v1026 = vpop.permute.xlu0 %1025
        %v1028 = vmul.f32 %v1026, %v351
        %v1029 = vmul.f32 %v1026, %v355
        %v1030 = vmul.f32 %v1026, %v359
        %v1031 = vmul.f32 %v1026, %v493
        %1036 = vrot.lane.b32.xlu0 %v1028, 110
        %v1037 = vpop.permute.xlu0 %1036
        %1038 = vrot.lane.b32.xlu0 %v1029, 110
        %v1039 = vpop.permute.xlu0 %1038
        %1040 = vrot.lane.b32.xlu0 %v1030, 110
        %v1041 = vpop.permute.xlu0 %1040
        %1042 = vrot.lane.b32.xlu0 %v1031, 110
        %v1043 = vpop.permute.xlu0 %1042
        %v1044 = vsel %vm539, %v1037, %v1039
        %v1045 = vsel %vm539, %v1039, %v1041
        %v1046 = vsel %vm539, %v1041, %v1043
        %v1051 = vadd.f32 %v989, %v1044
        %v1052 = vadd.f32 %v990, %v1045
        %v1053 = vadd.f32 %v991, %v1046
        %v1054 = vadd.f32 %v992, %v1043
        %1055 = vset.pattern.permute.xlu0 12
        %1056 = vperm.xlu0 %1055, %v757
        %v1057 = vpop.permute.xlu0 %1056
        %v1059 = vmul.f32 %v1057, %v240
        %v1060 = vmul.f32 %v1057, %v244
        %v1061 = vmul.f32 %v1057, %v248
        %v1062 = vmul.f32 %v1057, %v378
        %1067 = vrot.lane.b32.xlu0 %v1059, 109
        %v1068 = vpop.permute.xlu0 %1067
        %1069 = vrot.lane.b32.xlu0 %v1060, 109
        %v1070 = vpop.permute.xlu0 %1069
        %1071 = vrot.lane.b32.xlu0 %v1061, 109
        %v1072 = vpop.permute.xlu0 %1071
        %1073 = vrot.lane.b32.xlu0 %v1062, 109
        %v1074 = vpop.permute.xlu0 %1073
        %v1075 = vsel %vm656, %v1068, %v1070
        %v1076 = vsel %vm656, %v1070, %v1072
        %v1077 = vsel %vm656, %v1072, %v1074
        %v1082 = vadd.f32 %v1020, %v1075
        %v1083 = vadd.f32 %v1021, %v1076
        %v1084 = vadd.f32 %v1022, %v1077
        %v1085 = vadd.f32 %v1023, %v1074
        %1086 = vset.pattern.permute.xlu0 13
        %1087 = vperm.xlu0 %1086, %v757
        %v1088 = vpop.permute.xlu0 %1087
        %v1090 = vmul.f32 %v1088, %v277
        %v1091 = vmul.f32 %v1088, %v281
        %v1092 = vmul.f32 %v1088, %v285
        %v1093 = vmul.f32 %v1088, %v417
        %1098 = vrot.lane.b32.xlu0 %v1090, 109
        %v1099 = vpop.permute.xlu0 %1098
        %1100 = vrot.lane.b32.xlu0 %v1091, 109
        %v1101 = vpop.permute.xlu0 %1100
        %1102 = vrot.lane.b32.xlu0 %v1092, 109
        %v1103 = vpop.permute.xlu0 %1102
        %1104 = vrot.lane.b32.xlu0 %v1093, 109
        %v1105 = vpop.permute.xlu0 %1104
        %v1106 = vsel %vm656, %v1099, %v1101
        %v1107 = vsel %vm656, %v1101, %v1103
        %v1108 = vsel %vm656, %v1103, %v1105
        %v1113 = vadd.f32 %v1051, %v1106
        %v1114 = vadd.f32 %v1052, %v1107
        %v1115 = vadd.f32 %v1053, %v1108
        %v1116 = vadd.f32 %v1054, %v1105
        %1117 = vset.pattern.permute.xlu0 14
        %1118 = vperm.xlu0 %1117, %v757
        %v1119 = vpop.permute.xlu0 %1118
        %v1121 = vmul.f32 %v1119, %v314
        %v1122 = vmul.f32 %v1119, %v318
        %v1123 = vmul.f32 %v1119, %v322
        %v1124 = vmul.f32 %v1119, %v455
        %1129 = vrot.lane.b32.xlu0 %v1121, 109
        %v1130 = vpop.permute.xlu0 %1129
        %1131 = vrot.lane.b32.xlu0 %v1122, 109
        %v1132 = vpop.permute.xlu0 %1131
        %1133 = vrot.lane.b32.xlu0 %v1123, 109
        %v1134 = vpop.permute.xlu0 %1133
        %1135 = vrot.lane.b32.xlu0 %v1124, 109
        %v1136 = vpop.permute.xlu0 %1135
        %v1137 = vsel %vm656, %v1130, %v1132
        %v1138 = vsel %vm656, %v1132, %v1134
        %v1139 = vsel %vm656, %v1134, %v1136
        %v1144 = vadd.f32 %v1082, %v1137
        %v1145 = vadd.f32 %v1083, %v1138
        %v1146 = vadd.f32 %v1084, %v1139
        %v1147 = vadd.f32 %v1085, %v1136
        %1148 = vset.pattern.permute.xlu0 15
        %1149 = vperm.xlu0 %1148, %v757
        %v1150 = vpop.permute.xlu0 %1149
        %v1152 = vmul.f32 %v1150, %v351
        %v1153 = vmul.f32 %v1150, %v355
        %v1154 = vmul.f32 %v1150, %v359
        %v1155 = vmul.f32 %v1150, %v493
        %1160 = vrot.lane.b32.xlu0 %v1152, 109
        %v1161 = vpop.permute.xlu0 %1160
        %1162 = vrot.lane.b32.xlu0 %v1153, 109
        %v1163 = vpop.permute.xlu0 %1162
        %1164 = vrot.lane.b32.xlu0 %v1154, 109
        %v1165 = vpop.permute.xlu0 %1164
        %1166 = vrot.lane.b32.xlu0 %v1155, 109
        %v1167 = vpop.permute.xlu0 %1166
        %v1168 = vsel %vm656, %v1161, %v1163
        %v1169 = vsel %vm656, %v1163, %v1165
        %v1170 = vsel %vm656, %v1165, %v1167
        %v1175 = vadd.f32 %v1113, %v1168
        %v1176 = vadd.f32 %v1114, %v1169
        %v1177 = vadd.f32 %v1115, %v1170
        %v1178 = vadd.f32 %v1116, %v1167
        %v1179 = vadd.f32 %v1144, %v1175
        %v1180 = vadd.f32 %v1145, %v1176
        %v1181 = vadd.f32 %v1146, %v1177
        %v1182 = vadd.f32 %v1147, %v1178
        %s1183 = scalar_lea.vmem [#allocation2], 16
        %v1184 = vld [vmem:[%s1183] sm:$0xff]
        %1186 = vset.pattern.permute.xlu0 0
        %1187 = vperm.xlu0 %1186, %v1184
        %v1188 = vpop.permute.xlu0 %1187
        %v1190 = vmul.f32 %v1188, %v240
        %v1191 = vmul.f32 %v1188, %v244
        %v1192 = vmul.f32 %v1188, %v248
        %v1193 = vmul.f32 %v1188, %v378
        %v1194 = vadd.f32 %v1190, 0.0
        %v1195 = vadd.f32 %v1191, 0.0
        %v1196 = vadd.f32 %v1192, 0.0
        %v1197 = vadd.f32 %v1193, 0.0
        %1198 = vset.pattern.permute.xlu0 1
        %1199 = vperm.xlu0 %1198, %v1184
        %v1200 = vpop.permute.xlu0 %1199
        %v1202 = vmul.f32 %v1200, %v277
        %v1203 = vmul.f32 %v1200, %v281
        %v1204 = vmul.f32 %v1200, %v285
        %v1205 = vmul.f32 %v1200, %v417
        %v1206 = vadd.f32 %v1202, 0.0
        %v1207 = vadd.f32 %v1203, 0.0
        %v1208 = vadd.f32 %v1204, 0.0
        %v1209 = vadd.f32 %v1205, 0.0
        %1210 = vset.pattern.permute.xlu0 2
        %1211 = vperm.xlu0 %1210, %v1184
        %v1212 = vpop.permute.xlu0 %1211
        %v1214 = vmul.f32 %v1212, %v314
        %v1215 = vmul.f32 %v1212, %v318
        %v1216 = vmul.f32 %v1212, %v322
        %v1217 = vmul.f32 %v1212, %v455
        %v1218 = vadd.f32 %v1194, %v1214
        %v1219 = vadd.f32 %v1195, %v1215
        %v1220 = vadd.f32 %v1196, %v1216
        %v1221 = vadd.f32 %v1197, %v1217
        %1222 = vset.pattern.permute.xlu0 3
        %1223 = vperm.xlu0 %1222, %v1184
        %v1224 = vpop.permute.xlu0 %1223
        %v1226 = vmul.f32 %v1224, %v351
        %v1227 = vmul.f32 %v1224, %v355
        %v1228 = vmul.f32 %v1224, %v359
        %v1229 = vmul.f32 %v1224, %v493
        %v1230 = vadd.f32 %v1206, %v1226
        %v1231 = vadd.f32 %v1207, %v1227
        %v1232 = vadd.f32 %v1208, %v1228
        %v1233 = vadd.f32 %v1209, %v1229
        %1234 = vset.pattern.permute.xlu0 4
        %1235 = vperm.xlu0 %1234, %v1184
        %v1236 = vpop.permute.xlu0 %1235
        %v1238 = vmul.f32 %v1236, %v240
        %v1239 = vmul.f32 %v1236, %v244
        %v1240 = vmul.f32 %v1236, %v248
        %v1241 = vmul.f32 %v1236, %v378
        %1246 = vrot.lane.b32.xlu0 %v1238, 127
        %v1247 = vpop.permute.xlu0 %1246
        %1248 = vrot.lane.b32.xlu0 %v1239, 127
        %v1249 = vpop.permute.xlu0 %1248
        %1250 = vrot.lane.b32.xlu0 %v1240, 127
        %v1251 = vpop.permute.xlu0 %1250
        %1252 = vrot.lane.b32.xlu0 %v1241, 127
        %v1253 = vpop.permute.xlu0 %1252
        %v1254 = vsel %vm395, %v1247, %v1249
        %v1255 = vsel %vm395, %v1249, %v1251
        %v1256 = vsel %vm395, %v1251, %v1253
        %v1261 = vadd.f32 %v1218, %v1254
        %v1262 = vadd.f32 %v1219, %v1255
        %v1263 = vadd.f32 %v1220, %v1256
        %v1264 = vadd.f32 %v1221, %v1253
        %1265 = vset.pattern.permute.xlu0 5
        %1266 = vperm.xlu0 %1265, %v1184
        %v1267 = vpop.permute.xlu0 %1266
        %v1269 = vmul.f32 %v1267, %v277
        %v1270 = vmul.f32 %v1267, %v281
        %v1271 = vmul.f32 %v1267, %v285
        %v1272 = vmul.f32 %v1267, %v417
        %1277 = vrot.lane.b32.xlu0 %v1269, 127
        %v1278 = vpop.permute.xlu0 %1277
        %1279 = vrot.lane.b32.xlu0 %v1270, 127
        %v1280 = vpop.permute.xlu0 %1279
        %1281 = vrot.lane.b32.xlu0 %v1271, 127
        %v1282 = vpop.permute.xlu0 %1281
        %1283 = vrot.lane.b32.xlu0 %v1272, 127
        %v1284 = vpop.permute.xlu0 %1283
        %v1285 = vsel %vm395, %v1278, %v1280
        %v1286 = vsel %vm395, %v1280, %v1282
        %v1287 = vsel %vm395, %v1282, %v1284
        %v1292 = vadd.f32 %v1230, %v1285
        %v1293 = vadd.f32 %v1231, %v1286
        %v1294 = vadd.f32 %v1232, %v1287
        %v1295 = vadd.f32 %v1233, %v1284
        %1296 = vset.pattern.permute.xlu0 6
        %1297 = vperm.xlu0 %1296, %v1184
        %v1298 = vpop.permute.xlu0 %1297
        %v1300 = vmul.f32 %v1298, %v314
        %v1301 = vmul.f32 %v1298, %v318
        %v1302 = vmul.f32 %v1298, %v322
        %v1303 = vmul.f32 %v1298, %v455
        %1308 = vrot.lane.b32.xlu0 %v1300, 127
        %v1309 = vpop.permute.xlu0 %1308
        %1310 = vrot.lane.b32.xlu0 %v1301, 127
        %v1311 = vpop.permute.xlu0 %1310
        %1312 = vrot.lane.b32.xlu0 %v1302, 127
        %v1313 = vpop.permute.xlu0 %1312
        %1314 = vrot.lane.b32.xlu0 %v1303, 127
        %v1315 = vpop.permute.xlu0 %1314
        %v1316 = vsel %vm395, %v1309, %v1311
        %v1317 = vsel %vm395, %v1311, %v1313
        %v1318 = vsel %vm395, %v1313, %v1315
        %v1323 = vadd.f32 %v1261, %v1316
        %v1324 = vadd.f32 %v1262, %v1317
        %v1325 = vadd.f32 %v1263, %v1318
        %v1326 = vadd.f32 %v1264, %v1315
        %1327 = vset.pattern.permute.xlu0 7
        %1328 = vperm.xlu0 %1327, %v1184
        %v1329 = vpop.permute.xlu0 %1328
        %v1331 = vmul.f32 %v1329, %v351
        %v1332 = vmul.f32 %v1329, %v355
        %v1333 = vmul.f32 %v1329, %v359
        %v1334 = vmul.f32 %v1329, %v493
        %1339 = vrot.lane.b32.xlu0 %v1331, 127
        %v1340 = vpop.permute.xlu0 %1339
        %1341 = vrot.lane.b32.xlu0 %v1332, 127
        %v1342 = vpop.permute.xlu0 %1341
        %1343 = vrot.lane.b32.xlu0 %v1333, 127
        %v1344 = vpop.permute.xlu0 %1343
        %1345 = vrot.lane.b32.xlu0 %v1334, 127
        %v1346 = vpop.permute.xlu0 %1345
        %v1347 = vsel %vm395, %v1340, %v1342
        %v1348 = vsel %vm395, %v1342, %v1344
        %v1349 = vsel %vm395, %v1344, %v1346
        %v1354 = vadd.f32 %v1292, %v1347
        %v1355 = vadd.f32 %v1293, %v1348
        %v1356 = vadd.f32 %v1294, %v1349
        %v1357 = vadd.f32 %v1295, %v1346
        %1358 = vset.pattern.permute.xlu0 8
        %1359 = vperm.xlu0 %1358, %v1184
        %v1360 = vpop.permute.xlu0 %1359
        %v1362 = vmul.f32 %v1360, %v240
        %v1363 = vmul.f32 %v1360, %v244
        %v1364 = vmul.f32 %v1360, %v248
        %v1365 = vmul.f32 %v1360, %v378
        %1370 = vrot.lane.b32.xlu0 %v1362, 110
        %v1371 = vpop.permute.xlu0 %1370
        %1372 = vrot.lane.b32.xlu0 %v1363, 110
        %v1373 = vpop.permute.xlu0 %1372
        %1374 = vrot.lane.b32.xlu0 %v1364, 110
        %v1375 = vpop.permute.xlu0 %1374
        %1376 = vrot.lane.b32.xlu0 %v1365, 110
        %v1377 = vpop.permute.xlu0 %1376
        %v1378 = vsel %vm539, %v1371, %v1373
        %v1379 = vsel %vm539, %v1373, %v1375
        %v1380 = vsel %vm539, %v1375, %v1377
        %v1385 = vadd.f32 %v1323, %v1378
        %v1386 = vadd.f32 %v1324, %v1379
        %v1387 = vadd.f32 %v1325, %v1380
        %v1388 = vadd.f32 %v1326, %v1377
        %1389 = vset.pattern.permute.xlu0 9
        %1390 = vperm.xlu0 %1389, %v1184
        %v1391 = vpop.permute.xlu0 %1390
        %v1393 = vmul.f32 %v1391, %v277
        %v1394 = vmul.f32 %v1391, %v281
        %v1395 = vmul.f32 %v1391, %v285
        %v1396 = vmul.f32 %v1391, %v417
        %1401 = vrot.lane.b32.xlu0 %v1393, 110
        %v1402 = vpop.permute.xlu0 %1401
        %1403 = vrot.lane.b32.xlu0 %v1394, 110
        %v1404 = vpop.permute.xlu0 %1403
        %1405 = vrot.lane.b32.xlu0 %v1395, 110
        %v1406 = vpop.permute.xlu0 %1405
        %1407 = vrot.lane.b32.xlu0 %v1396, 110
        %v1408 = vpop.permute.xlu0 %1407
        %v1409 = vsel %vm539, %v1402, %v1404
        %v1410 = vsel %vm539, %v1404, %v1406
        %v1411 = vsel %vm539, %v1406, %v1408
        %v1416 = vadd.f32 %v1354, %v1409
        %v1417 = vadd.f32 %v1355, %v1410
        %v1418 = vadd.f32 %v1356, %v1411
        %v1419 = vadd.f32 %v1357, %v1408
        %1420 = vset.pattern.permute.xlu0 10
        %1421 = vperm.xlu0 %1420, %v1184
        %v1422 = vpop.permute.xlu0 %1421
        %v1424 = vmul.f32 %v1422, %v314
        %v1425 = vmul.f32 %v1422, %v318
        %v1426 = vmul.f32 %v1422, %v322
        %v1427 = vmul.f32 %v1422, %v455
        %1432 = vrot.lane.b32.xlu0 %v1424, 110
        %v1433 = vpop.permute.xlu0 %1432
        %1434 = vrot.lane.b32.xlu0 %v1425, 110
        %v1435 = vpop.permute.xlu0 %1434
        %1436 = vrot.lane.b32.xlu0 %v1426, 110
        %v1437 = vpop.permute.xlu0 %1436
        %1438 = vrot.lane.b32.xlu0 %v1427, 110
        %v1439 = vpop.permute.xlu0 %1438
        %v1440 = vsel %vm539, %v1433, %v1435
        %v1441 = vsel %vm539, %v1435, %v1437
        %v1442 = vsel %vm539, %v1437, %v1439
        %v1447 = vadd.f32 %v1385, %v1440
        %v1448 = vadd.f32 %v1386, %v1441
        %v1449 = vadd.f32 %v1387, %v1442
        %v1450 = vadd.f32 %v1388, %v1439
        %1451 = vset.pattern.permute.xlu0 11
        %1452 = vperm.xlu0 %1451, %v1184
        %v1453 = vpop.permute.xlu0 %1452
        %v1455 = vmul.f32 %v1453, %v351
        %v1456 = vmul.f32 %v1453, %v355
        %v1457 = vmul.f32 %v1453, %v359
        %v1458 = vmul.f32 %v1453, %v493
        %1463 = vrot.lane.b32.xlu0 %v1455, 110
        %v1464 = vpop.permute.xlu0 %1463
        %1465 = vrot.lane.b32.xlu0 %v1456, 110
        %v1466 = vpop.permute.xlu0 %1465
        %1467 = vrot.lane.b32.xlu0 %v1457, 110
        %v1468 = vpop.permute.xlu0 %1467
        %1469 = vrot.lane.b32.xlu0 %v1458, 110
        %v1470 = vpop.permute.xlu0 %1469
        %v1471 = vsel %vm539, %v1464, %v1466
        %v1472 = vsel %vm539, %v1466, %v1468
        %v1473 = vsel %vm539, %v1468, %v1470
        %v1478 = vadd.f32 %v1416, %v1471
        %v1479 = vadd.f32 %v1417, %v1472
        %v1480 = vadd.f32 %v1418, %v1473
        %v1481 = vadd.f32 %v1419, %v1470
        %1482 = vset.pattern.permute.xlu0 12
        %1483 = vperm.xlu0 %1482, %v1184
        %v1484 = vpop.permute.xlu0 %1483
        %v1486 = vmul.f32 %v1484, %v240
        %v1487 = vmul.f32 %v1484, %v244
        %v1488 = vmul.f32 %v1484, %v248
        %v1489 = vmul.f32 %v1484, %v378
        %1494 = vrot.lane.b32.xlu0 %v1486, 109
        %v1495 = vpop.permute.xlu0 %1494
        %1496 = vrot.lane.b32.xlu0 %v1487, 109
        %v1497 = vpop.permute.xlu0 %1496
        %1498 = vrot.lane.b32.xlu0 %v1488, 109
        %v1499 = vpop.permute.xlu0 %1498
        %1500 = vrot.lane.b32.xlu0 %v1489, 109
        %v1501 = vpop.permute.xlu0 %1500
        %v1502 = vsel %vm656, %v1495, %v1497
        %v1503 = vsel %vm656, %v1497, %v1499
        %v1504 = vsel %vm656, %v1499, %v1501
        %v1509 = vadd.f32 %v1447, %v1502
        %v1510 = vadd.f32 %v1448, %v1503
        %v1511 = vadd.f32 %v1449, %v1504
        %v1512 = vadd.f32 %v1450, %v1501
        %1513 = vset.pattern.permute.xlu0 13
        %1514 = vperm.xlu0 %1513, %v1184
        %v1515 = vpop.permute.xlu0 %1514
        %v1517 = vmul.f32 %v1515, %v277
        %v1518 = vmul.f32 %v1515, %v281
        %v1519 = vmul.f32 %v1515, %v285
        %v1520 = vmul.f32 %v1515, %v417
        %1525 = vrot.lane.b32.xlu0 %v1517, 109
        %v1526 = vpop.permute.xlu0 %1525
        %1527 = vrot.lane.b32.xlu0 %v1518, 109
        %v1528 = vpop.permute.xlu0 %1527
        %1529 = vrot.lane.b32.xlu0 %v1519, 109
        %v1530 = vpop.permute.xlu0 %1529
        %1531 = vrot.lane.b32.xlu0 %v1520, 109
        %v1532 = vpop.permute.xlu0 %1531
        %v1533 = vsel %vm656, %v1526, %v1528
        %v1534 = vsel %vm656, %v1528, %v1530
        %v1535 = vsel %vm656, %v1530, %v1532
        %v1540 = vadd.f32 %v1478, %v1533
        %v1541 = vadd.f32 %v1479, %v1534
        %v1542 = vadd.f32 %v1480, %v1535
        %v1543 = vadd.f32 %v1481, %v1532
        %1544 = vset.pattern.permute.xlu0 14
        %1545 = vperm.xlu0 %1544, %v1184
        %v1546 = vpop.permute.xlu0 %1545
        %v1548 = vmul.f32 %v1546, %v314
        %v1549 = vmul.f32 %v1546, %v318
        %v1550 = vmul.f32 %v1546, %v322
        %v1551 = vmul.f32 %v1546, %v455
        %1556 = vrot.lane.b32.xlu0 %v1548, 109
        %v1557 = vpop.permute.xlu0 %1556
        %1558 = vrot.lane.b32.xlu0 %v1549, 109
        %v1559 = vpop.permute.xlu0 %1558
        %1560 = vrot.lane.b32.xlu0 %v1550, 109
        %v1561 = vpop.permute.xlu0 %1560
        %1562 = vrot.lane.b32.xlu0 %v1551, 109
        %v1563 = vpop.permute.xlu0 %1562
        %v1564 = vsel %vm656, %v1557, %v1559
        %v1565 = vsel %vm656, %v1559, %v1561
        %v1566 = vsel %vm656, %v1561, %v1563
        %v1571 = vadd.f32 %v1509, %v1564
        %v1572 = vadd.f32 %v1510, %v1565
        %v1573 = vadd.f32 %v1511, %v1566
        %v1574 = vadd.f32 %v1512, %v1563
        %1575 = vset.pattern.permute.xlu0 15
        %1576 = vperm.xlu0 %1575, %v1184
        %v1577 = vpop.permute.xlu0 %1576
        %v1579 = vmul.f32 %v1577, %v351
        %v1580 = vmul.f32 %v1577, %v355
        %v1581 = vmul.f32 %v1577, %v359
        %v1582 = vmul.f32 %v1577, %v493
        %1587 = vrot.lane.b32.xlu0 %v1579, 109
        %v1588 = vpop.permute.xlu0 %1587
        %1589 = vrot.lane.b32.xlu0 %v1580, 109
        %v1590 = vpop.permute.xlu0 %1589
        %1591 = vrot.lane.b32.xlu0 %v1581, 109
        %v1592 = vpop.permute.xlu0 %1591
        %1593 = vrot.lane.b32.xlu0 %v1582, 109
        %v1594 = vpop.permute.xlu0 %1593
        %v1595 = vsel %vm656, %v1588, %v1590
        %v1596 = vsel %vm656, %v1590, %v1592
        %v1597 = vsel %vm656, %v1592, %v1594
        %v1602 = vadd.f32 %v1540, %v1595
        %v1603 = vadd.f32 %v1541, %v1596
        %v1604 = vadd.f32 %v1542, %v1597
        %v1605 = vadd.f32 %v1543, %v1594
        %v1606 = vadd.f32 %v1571, %v1602
        %v1607 = vadd.f32 %v1572, %v1603
        %v1608 = vadd.f32 %v1573, %v1604
        %v1609 = vadd.f32 %v1574, %v1605
        %s1610 = scalar_lea.vmem [#allocation2], 24
        %v1611 = vld [vmem:[%s1610] sm:$0xff]
        %1613 = vset.pattern.permute.xlu0 0
        %1614 = vperm.xlu0 %1613, %v1611
        %v1615 = vpop.permute.xlu0 %1614
        %v1617 = vmul.f32 %v1615, %v240
        %v1618 = vmul.f32 %v1615, %v244
        %v1619 = vmul.f32 %v1615, %v248
        %v1620 = vmul.f32 %v1615, %v378
        %v1621 = vadd.f32 %v1617, 0.0
        %v1622 = vadd.f32 %v1618, 0.0
        %v1623 = vadd.f32 %v1619, 0.0
        %v1624 = vadd.f32 %v1620, 0.0
        %1625 = vset.pattern.permute.xlu0 1
        %1626 = vperm.xlu0 %1625, %v1611
        %v1627 = vpop.permute.xlu0 %1626
        %v1629 = vmul.f32 %v1627, %v277
        %v1630 = vmul.f32 %v1627, %v281
        %v1631 = vmul.f32 %v1627, %v285
        %v1632 = vmul.f32 %v1627, %v417
        %v1633 = vadd.f32 %v1629, 0.0
        %v1634 = vadd.f32 %v1630, 0.0
        %v1635 = vadd.f32 %v1631, 0.0
        %v1636 = vadd.f32 %v1632, 0.0
        %1637 = vset.pattern.permute.xlu0 2
        %1638 = vperm.xlu0 %1637, %v1611
        %v1639 = vpop.permute.xlu0 %1638
        %v1641 = vmul.f32 %v1639, %v314
        %v1642 = vmul.f32 %v1639, %v318
        %v1643 = vmul.f32 %v1639, %v322
        %v1644 = vmul.f32 %v1639, %v455
        %v1645 = vadd.f32 %v1621, %v1641
        %v1646 = vadd.f32 %v1622, %v1642
        %v1647 = vadd.f32 %v1623, %v1643
        %v1648 = vadd.f32 %v1624, %v1644
        %1649 = vset.pattern.permute.xlu0 3
        %1650 = vperm.xlu0 %1649, %v1611
        %v1651 = vpop.permute.xlu0 %1650
        %v1653 = vmul.f32 %v1651, %v351
        %v1654 = vmul.f32 %v1651, %v355
        %v1655 = vmul.f32 %v1651, %v359
        %v1656 = vmul.f32 %v1651, %v493
        %v1657 = vadd.f32 %v1633, %v1653
        %v1658 = vadd.f32 %v1634, %v1654
        %v1659 = vadd.f32 %v1635, %v1655
        %v1660 = vadd.f32 %v1636, %v1656
        %1661 = vset.pattern.permute.xlu0 4
        %1662 = vperm.xlu0 %1661, %v1611
        %v1663 = vpop.permute.xlu0 %1662
        %v1665 = vmul.f32 %v1663, %v240
        %v1666 = vmul.f32 %v1663, %v244
        %v1667 = vmul.f32 %v1663, %v248
        %v1668 = vmul.f32 %v1663, %v378
        %1673 = vrot.lane.b32.xlu0 %v1665, 127
        %v1674 = vpop.permute.xlu0 %1673
        %1675 = vrot.lane.b32.xlu0 %v1666, 127
        %v1676 = vpop.permute.xlu0 %1675
        %1677 = vrot.lane.b32.xlu0 %v1667, 127
        %v1678 = vpop.permute.xlu0 %1677
        %1679 = vrot.lane.b32.xlu0 %v1668, 127
        %v1680 = vpop.permute.xlu0 %1679
        %v1681 = vsel %vm395, %v1674, %v1676
        %v1682 = vsel %vm395, %v1676, %v1678
        %v1683 = vsel %vm395, %v1678, %v1680
        %v1688 = vadd.f32 %v1645, %v1681
        %v1689 = vadd.f32 %v1646, %v1682
        %v1690 = vadd.f32 %v1647, %v1683
        %v1691 = vadd.f32 %v1648, %v1680
        %1692 = vset.pattern.permute.xlu0 5
        %1693 = vperm.xlu0 %1692, %v1611
        %v1694 = vpop.permute.xlu0 %1693
        %v1696 = vmul.f32 %v1694, %v277
        %v1697 = vmul.f32 %v1694, %v281
        %v1698 = vmul.f32 %v1694, %v285
        %v1699 = vmul.f32 %v1694, %v417
        %1704 = vrot.lane.b32.xlu0 %v1696, 127
        %v1705 = vpop.permute.xlu0 %1704
        %1706 = vrot.lane.b32.xlu0 %v1697, 127
        %v1707 = vpop.permute.xlu0 %1706
        %1708 = vrot.lane.b32.xlu0 %v1698, 127
        %v1709 = vpop.permute.xlu0 %1708
        %1710 = vrot.lane.b32.xlu0 %v1699, 127
        %v1711 = vpop.permute.xlu0 %1710
        %v1712 = vsel %vm395, %v1705, %v1707
        %v1713 = vsel %vm395, %v1707, %v1709
        %v1714 = vsel %vm395, %v1709, %v1711
        %v1719 = vadd.f32 %v1657, %v1712
        %v1720 = vadd.f32 %v1658, %v1713
        %v1721 = vadd.f32 %v1659, %v1714
        %v1722 = vadd.f32 %v1660, %v1711
        %1723 = vset.pattern.permute.xlu0 6
        %1724 = vperm.xlu0 %1723, %v1611
        %v1725 = vpop.permute.xlu0 %1724
        %v1727 = vmul.f32 %v1725, %v314
        %v1728 = vmul.f32 %v1725, %v318
        %v1729 = vmul.f32 %v1725, %v322
        %v1730 = vmul.f32 %v1725, %v455
        %1735 = vrot.lane.b32.xlu0 %v1727, 127
        %v1736 = vpop.permute.xlu0 %1735
        %1737 = vrot.lane.b32.xlu0 %v1728, 127
        %v1738 = vpop.permute.xlu0 %1737
        %1739 = vrot.lane.b32.xlu0 %v1729, 127
        %v1740 = vpop.permute.xlu0 %1739
        %1741 = vrot.lane.b32.xlu0 %v1730, 127
        %v1742 = vpop.permute.xlu0 %1741
        %v1743 = vsel %vm395, %v1736, %v1738
        %v1744 = vsel %vm395, %v1738, %v1740
        %v1745 = vsel %vm395, %v1740, %v1742
        %v1750 = vadd.f32 %v1688, %v1743
        %v1751 = vadd.f32 %v1689, %v1744
        %v1752 = vadd.f32 %v1690, %v1745
        %v1753 = vadd.f32 %v1691, %v1742
        %1754 = vset.pattern.permute.xlu0 7
        %1755 = vperm.xlu0 %1754, %v1611
        %v1756 = vpop.permute.xlu0 %1755
        %v1758 = vmul.f32 %v1756, %v351
        %v1759 = vmul.f32 %v1756, %v355
        %v1760 = vmul.f32 %v1756, %v359
        %v1761 = vmul.f32 %v1756, %v493
        %1766 = vrot.lane.b32.xlu0 %v1758, 127
        %v1767 = vpop.permute.xlu0 %1766
        %1768 = vrot.lane.b32.xlu0 %v1759, 127
        %v1769 = vpop.permute.xlu0 %1768
        %1770 = vrot.lane.b32.xlu0 %v1760, 127
        %v1771 = vpop.permute.xlu0 %1770
        %1772 = vrot.lane.b32.xlu0 %v1761, 127
        %v1773 = vpop.permute.xlu0 %1772
        %v1774 = vsel %vm395, %v1767, %v1769
        %v1775 = vsel %vm395, %v1769, %v1771
        %v1776 = vsel %vm395, %v1771, %v1773
        %v1781 = vadd.f32 %v1719, %v1774
        %v1782 = vadd.f32 %v1720, %v1775
        %v1783 = vadd.f32 %v1721, %v1776
        %v1784 = vadd.f32 %v1722, %v1773
        %1785 = vset.pattern.permute.xlu0 8
        %1786 = vperm.xlu0 %1785, %v1611
        %v1787 = vpop.permute.xlu0 %1786
        %v1789 = vmul.f32 %v1787, %v240
        %v1790 = vmul.f32 %v1787, %v244
        %v1791 = vmul.f32 %v1787, %v248
        %v1792 = vmul.f32 %v1787, %v378
        %1797 = vrot.lane.b32.xlu0 %v1789, 110
        %v1798 = vpop.permute.xlu0 %1797
        %1799 = vrot.lane.b32.xlu0 %v1790, 110
        %v1800 = vpop.permute.xlu0 %1799
        %1801 = vrot.lane.b32.xlu0 %v1791, 110
        %v1802 = vpop.permute.xlu0 %1801
        %1803 = vrot.lane.b32.xlu0 %v1792, 110
        %v1804 = vpop.permute.xlu0 %1803
        %v1805 = vsel %vm539, %v1798, %v1800
        %v1806 = vsel %vm539, %v1800, %v1802
        %v1807 = vsel %vm539, %v1802, %v1804
        %v1812 = vadd.f32 %v1750, %v1805
        %v1813 = vadd.f32 %v1751, %v1806
        %v1814 = vadd.f32 %v1752, %v1807
        %v1815 = vadd.f32 %v1753, %v1804
        %1816 = vset.pattern.permute.xlu0 9
        %1817 = vperm.xlu0 %1816, %v1611
        %v1818 = vpop.permute.xlu0 %1817
        %v1820 = vmul.f32 %v1818, %v277
        %v1821 = vmul.f32 %v1818, %v281
        %v1822 = vmul.f32 %v1818, %v285
        %v1823 = vmul.f32 %v1818, %v417
        %1828 = vrot.lane.b32.xlu0 %v1820, 110
        %v1829 = vpop.permute.xlu0 %1828
        %1830 = vrot.lane.b32.xlu0 %v1821, 110
        %v1831 = vpop.permute.xlu0 %1830
        %1832 = vrot.lane.b32.xlu0 %v1822, 110
        %v1833 = vpop.permute.xlu0 %1832
        %1834 = vrot.lane.b32.xlu0 %v1823, 110
        %v1835 = vpop.permute.xlu0 %1834
        %v1836 = vsel %vm539, %v1829, %v1831
        %v1837 = vsel %vm539, %v1831, %v1833
        %v1838 = vsel %vm539, %v1833, %v1835
        %v1843 = vadd.f32 %v1781, %v1836
        %v1844 = vadd.f32 %v1782, %v1837
        %v1845 = vadd.f32 %v1783, %v1838
        %v1846 = vadd.f32 %v1784, %v1835
        %1847 = vset.pattern.permute.xlu0 10
        %1848 = vperm.xlu0 %1847, %v1611
        %v1849 = vpop.permute.xlu0 %1848
        %v1851 = vmul.f32 %v1849, %v314
        %v1852 = vmul.f32 %v1849, %v318
        %v1853 = vmul.f32 %v1849, %v322
        %v1854 = vmul.f32 %v1849, %v455
        %1859 = vrot.lane.b32.xlu0 %v1851, 110
        %v1860 = vpop.permute.xlu0 %1859
        %1861 = vrot.lane.b32.xlu0 %v1852, 110
        %v1862 = vpop.permute.xlu0 %1861
        %1863 = vrot.lane.b32.xlu0 %v1853, 110
        %v1864 = vpop.permute.xlu0 %1863
        %1865 = vrot.lane.b32.xlu0 %v1854, 110
        %v1866 = vpop.permute.xlu0 %1865
        %v1867 = vsel %vm539, %v1860, %v1862
        %v1868 = vsel %vm539, %v1862, %v1864
        %v1869 = vsel %vm539, %v1864, %v1866
        %v1874 = vadd.f32 %v1812, %v1867
        %v1875 = vadd.f32 %v1813, %v1868
        %v1876 = vadd.f32 %v1814, %v1869
        %v1877 = vadd.f32 %v1815, %v1866
        %1878 = vset.pattern.permute.xlu0 11
        %1879 = vperm.xlu0 %1878, %v1611
        %v1880 = vpop.permute.xlu0 %1879
        %v1882 = vmul.f32 %v1880, %v351
        %v1883 = vmul.f32 %v1880, %v355
        %v1884 = vmul.f32 %v1880, %v359
        %v1885 = vmul.f32 %v1880, %v493
        %1890 = vrot.lane.b32.xlu0 %v1882, 110
        %v1891 = vpop.permute.xlu0 %1890
        %1892 = vrot.lane.b32.xlu0 %v1883, 110
        %v1893 = vpop.permute.xlu0 %1892
        %1894 = vrot.lane.b32.xlu0 %v1884, 110
        %v1895 = vpop.permute.xlu0 %1894
        %1896 = vrot.lane.b32.xlu0 %v1885, 110
        %v1897 = vpop.permute.xlu0 %1896
        %v1898 = vsel %vm539, %v1891, %v1893
        %v1899 = vsel %vm539, %v1893, %v1895
        %v1900 = vsel %vm539, %v1895, %v1897
        %v1905 = vadd.f32 %v1843, %v1898
        %v1906 = vadd.f32 %v1844, %v1899
        %v1907 = vadd.f32 %v1845, %v1900
        %v1908 = vadd.f32 %v1846, %v1897
        %1909 = vset.pattern.permute.xlu0 12
        %1910 = vperm.xlu0 %1909, %v1611
        %v1911 = vpop.permute.xlu0 %1910
        %v1913 = vmul.f32 %v1911, %v240
        %v1914 = vmul.f32 %v1911, %v244
        %v1915 = vmul.f32 %v1911, %v248
        %v1916 = vmul.f32 %v1911, %v378
        %1921 = vrot.lane.b32.xlu0 %v1913, 109
        %v1922 = vpop.permute.xlu0 %1921
        %1923 = vrot.lane.b32.xlu0 %v1914, 109
        %v1924 = vpop.permute.xlu0 %1923
        %1925 = vrot.lane.b32.xlu0 %v1915, 109
        %v1926 = vpop.permute.xlu0 %1925
        %1927 = vrot.lane.b32.xlu0 %v1916, 109
        %v1928 = vpop.permute.xlu0 %1927
        %v1929 = vsel %vm656, %v1922, %v1924
        %v1930 = vsel %vm656, %v1924, %v1926
        %v1931 = vsel %vm656, %v1926, %v1928
        %v1936 = vadd.f32 %v1874, %v1929
        %v1937 = vadd.f32 %v1875, %v1930
        %v1938 = vadd.f32 %v1876, %v1931
        %v1939 = vadd.f32 %v1877, %v1928
        %1940 = vset.pattern.permute.xlu0 13
        %1941 = vperm.xlu0 %1940, %v1611
        %v1942 = vpop.permute.xlu0 %1941
        %v1944 = vmul.f32 %v1942, %v277
        %v1945 = vmul.f32 %v1942, %v281
        %v1946 = vmul.f32 %v1942, %v285
        %v1947 = vmul.f32 %v1942, %v417
        %1952 = vrot.lane.b32.xlu0 %v1944, 109
        %v1953 = vpop.permute.xlu0 %1952
        %1954 = vrot.lane.b32.xlu0 %v1945, 109
        %v1955 = vpop.permute.xlu0 %1954
        %1956 = vrot.lane.b32.xlu0 %v1946, 109
        %v1957 = vpop.permute.xlu0 %1956
        %1958 = vrot.lane.b32.xlu0 %v1947, 109
        %v1959 = vpop.permute.xlu0 %1958
        %v1960 = vsel %vm656, %v1953, %v1955
        %v1961 = vsel %vm656, %v1955, %v1957
        %v1962 = vsel %vm656, %v1957, %v1959
        %v1967 = vadd.f32 %v1905, %v1960
        %v1968 = vadd.f32 %v1906, %v1961
        %v1969 = vadd.f32 %v1907, %v1962
        %v1970 = vadd.f32 %v1908, %v1959
        %1971 = vset.pattern.permute.xlu0 14
        %1972 = vperm.xlu0 %1971, %v1611
        %v1973 = vpop.permute.xlu0 %1972
        %v1975 = vmul.f32 %v1973, %v314
        %v1976 = vmul.f32 %v1973, %v318
        %v1977 = vmul.f32 %v1973, %v322
        %v1978 = vmul.f32 %v1973, %v455
        %1983 = vrot.lane.b32.xlu0 %v1975, 109
        %v1984 = vpop.permute.xlu0 %1983
        %1985 = vrot.lane.b32.xlu0 %v1976, 109
        %v1986 = vpop.permute.xlu0 %1985
        %1987 = vrot.lane.b32.xlu0 %v1977, 109
        %v1988 = vpop.permute.xlu0 %1987
        %1989 = vrot.lane.b32.xlu0 %v1978, 109
        %v1990 = vpop.permute.xlu0 %1989
        %v1991 = vsel %vm656, %v1984, %v1986
        %v1992 = vsel %vm656, %v1986, %v1988
        %v1993 = vsel %vm656, %v1988, %v1990
        %v1998 = vadd.f32 %v1936, %v1991
        %v1999 = vadd.f32 %v1937, %v1992
        %v2000 = vadd.f32 %v1938, %v1993
        %v2001 = vadd.f32 %v1939, %v1990
        %2002 = vset.pattern.permute.xlu0 15
        %2003 = vperm.xlu0 %2002, %v1611
        %v2004 = vpop.permute.xlu0 %2003
        %v2006 = vmul.f32 %v2004, %v351
        %v2007 = vmul.f32 %v2004, %v355
        %v2008 = vmul.f32 %v2004, %v359
        %v2009 = vmul.f32 %v2004, %v493
        %2014 = vrot.lane.b32.xlu0 %v2006, 109
        %v2015 = vpop.permute.xlu0 %2014
        %2016 = vrot.lane.b32.xlu0 %v2007, 109
        %v2017 = vpop.permute.xlu0 %2016
        %2018 = vrot.lane.b32.xlu0 %v2008, 109
        %v2019 = vpop.permute.xlu0 %2018
        %2020 = vrot.lane.b32.xlu0 %v2009, 109
        %v2021 = vpop.permute.xlu0 %2020
        %v2022 = vsel %vm656, %v2015, %v2017
        %v2023 = vsel %vm656, %v2017, %v2019
        %v2024 = vsel %vm656, %v2019, %v2021
        %v2029 = vadd.f32 %v1967, %v2022
        %v2030 = vadd.f32 %v1968, %v2023
        %v2031 = vadd.f32 %v1969, %v2024
        %v2032 = vadd.f32 %v1970, %v2021
        %v2033 = vadd.f32 %v1998, %v2029
        %v2034 = vadd.f32 %v1999, %v2030
        %v2035 = vadd.f32 %v2000, %v2031
        %v2036 = vadd.f32 %v2001, %v2032
        %v2038 = vlaneseq
        %v2039 = vshrl.u32 %v2038, 7
        %v2040 = vsub.s32 0, %v2039
        %v2041 = vrot.slane %v213, %v2040
        %v2042 = vlaneseq
        %v2043 = vshrl.u32 %v2042, 7
        %v2044 = vsub.s32 1, %v2043
        %v2045 = vrot.slane %v213, %v2044
        %v2046 = vlaneseq
        %v2047 = vshrl.u32 %v2046, 7
        %v2048 = vsub.s32 2, %v2047
        %v2049 = vrot.slane %v213, %v2048
        %v2053 = vmul.f32 %v753, %v2041
        %v2054 = vmul.f32 %v754, %v2045
        %v2055 = vmul.f32 %v755, %v2049
        %v2056 = vadd.f32 %v2053, %v2054
        %v2057 = vadd.f32 %v2056, %v2055
        %2058 = vadd.xlane.f32.xlu0 %v2057
        %v2059 = vpop.xlane.xlu0 %2058
        %v2060 = vadd.f32 %v2059, 0.0
        %2061 = vrot.lane.b32.xlu0 %v2041, 1
        %v2062 = vpop.permute.xlu0 %2061
        %2063 = vrot.lane.b32.xlu0 %v2045, 1
        %v2064 = vpop.permute.xlu0 %2063
        %2065 = vrot.lane.b32.xlu0 %v2049, 1
        %v2066 = vpop.permute.xlu0 %2065
        %vm2067 = vcmask 7168
        %v2068 = vsel %vm2067, %v2062, %v2064
        %v2069 = vsel %vm2067, %v2064, %v2066
        %v2074 = vmul.f32 %v1179, %v2062
        %v2075 = vmul.f32 %v1180, %v2068
        %v2076 = vmul.f32 %v1181, %v2069
        %v2077 = vmul.f32 %v1182, %v2066
        %2082 = vrot.lane.b32.xlu0 %v2074, 127
        %v2083 = vpop.permute.xlu0 %2082
        %2084 = vrot.lane.b32.xlu0 %v2075, 127
        %v2085 = vpop.permute.xlu0 %2084
        %2086 = vrot.lane.b32.xlu0 %v2076, 127
        %v2087 = vpop.permute.xlu0 %2086
        %2088 = vrot.lane.b32.xlu0 %v2077, 127
        %v2089 = vpop.permute.xlu0 %2088
        %v2090 = vsel %vm395, %v2083, %v2085
        %v2091 = vsel %vm395, %v2085, %v2087
        %v2092 = vsel %vm395, %v2087, %v2089
        %v2096 = vadd.f32 %v2090, %v2091
        %v2097 = vadd.f32 %v2096, %v2092
        %2098 = vadd.xlane.f32.xlu0 %v2097
        %v2099 = vpop.xlane.xlu0 %2098
        %v2100 = vadd.f32 %v2060, %v2099
        %2101 = vrot.lane.b32.xlu0 %v2041, 18
        %v2102 = vpop.permute.xlu0 %2101
        %2103 = vrot.lane.b32.xlu0 %v2045, 18
        %v2104 = vpop.permute.xlu0 %2103
        %2105 = vrot.lane.b32.xlu0 %v2049, 18
        %v2106 = vpop.permute.xlu0 %2105
        %vm2107 = vcmask 146432
        %v2108 = vsel %vm2107, %v2102, %v2104
        %v2109 = vsel %vm2107, %v2104, %v2106
        %v2114 = vmul.f32 %v1606, %v2102
        %v2115 = vmul.f32 %v1607, %v2108
        %v2116 = vmul.f32 %v1608, %v2109
        %v2117 = vmul.f32 %v1609, %v2106
        %2122 = vrot.lane.b32.xlu0 %v2114, 110
        %v2123 = vpop.permute.xlu0 %2122
        %2124 = vrot.lane.b32.xlu0 %v2115, 110
        %v2125 = vpop.permute.xlu0 %2124
        %2126 = vrot.lane.b32.xlu0 %v2116, 110
        %v2127 = vpop.permute.xlu0 %2126
        %2128 = vrot.lane.b32.xlu0 %v2117, 110
        %v2129 = vpop.permute.xlu0 %2128
        %v2130 = vsel %vm539, %v2123, %v2125
        %v2131 = vsel %vm539, %v2125, %v2127
        %v2132 = vsel %vm539, %v2127, %v2129
        %v2136 = vadd.f32 %v2130, %v2131
        %v2137 = vadd.f32 %v2136, %v2132
        %2138 = vadd.xlane.f32.xlu0 %v2137
        %v2139 = vpop.xlane.xlu0 %2138
        %v2140 = vadd.f32 %v2100, %v2139
        %2141 = vrot.lane.b32.xlu0 %v2041, 19
        %v2142 = vpop.permute.xlu0 %2141
        %2143 = vrot.lane.b32.xlu0 %v2045, 19
        %v2144 = vpop.permute.xlu0 %2143
        %2145 = vrot.lane.b32.xlu0 %v2049, 19
        %v2146 = vpop.permute.xlu0 %2145
        %vm2147 = vcmask 154624
        %v2148 = vsel %vm2147, %v2142, %v2144
        %v2149 = vsel %vm2147, %v2144, %v2146
        %v2154 = vmul.f32 %v2033, %v2142
        %v2155 = vmul.f32 %v2034, %v2148
        %v2156 = vmul.f32 %v2035, %v2149
        %v2157 = vmul.f32 %v2036, %v2146
        %2162 = vrot.lane.b32.xlu0 %v2154, 109
        %v2163 = vpop.permute.xlu0 %2162
        %2164 = vrot.lane.b32.xlu0 %v2155, 109
        %v2165 = vpop.permute.xlu0 %2164
        %2166 = vrot.lane.b32.xlu0 %v2156, 109
        %v2167 = vpop.permute.xlu0 %2166
        %2168 = vrot.lane.b32.xlu0 %v2157, 109
        %v2169 = vpop.permute.xlu0 %2168
        %v2170 = vsel %vm656, %v2163, %v2165
        %v2171 = vsel %vm656, %v2165, %v2167
        %v2172 = vsel %vm656, %v2167, %v2169
        %v2176 = vadd.f32 %v2170, %v2171
        %v2177 = vadd.f32 %v2176, %v2172
        %2178 = vadd.xlane.f32.xlu0 %v2177
        %v2179 = vpop.xlane.xlu0 %2178
        %v2180 = vadd.f32 %v2140, %v2179
        %v2181 = vmul.f32 %v2180, 0.0009765625
        %v2182 = vsub.f32 %v753, %v2181
        %v2183 = vsub.f32 %v754, %v2181
        %v2184 = vsub.f32 %v755, %v2181
        %v2185 = vmul.f32 %v2182, %v2041
        %v2186 = vmul.f32 %v2183, %v2045
        %v2187 = vmul.f32 %v2184, %v2049
        %v2188 = vmul.f32 %v2185, %v2185
        %v2189 = vmul.f32 %v2186, %v2186
        %v2190 = vmul.f32 %v2187, %v2187
        %v2191 = vadd.f32 %v2188, %v2189
        %v2192 = vadd.f32 %v2191, %v2190
        %2193 = vadd.xlane.f32.xlu0 %v2192
        %v2194 = vpop.xlane.xlu0 %2193
        %v2195 = vadd.f32 %v2194, 0.0
        %v2196 = vsub.f32 %v1179, %v2181
        %v2197 = vsub.f32 %v1180, %v2181
        %v2198 = vsub.f32 %v1181, %v2181
        %v2199 = vsub.f32 %v1182, %v2181
        %v2200 = vmul.f32 %v2196, %v2062
        %v2201 = vmul.f32 %v2197, %v2068
        %v2202 = vmul.f32 %v2198, %v2069
        %v2203 = vmul.f32 %v2199, %v2066
        %v2204 = vmul.f32 %v2200, %v2200
        %v2205 = vmul.f32 %v2201, %v2201
        %v2206 = vmul.f32 %v2202, %v2202
        %v2207 = vmul.f32 %v2203, %v2203
        %2212 = vrot.lane.b32.xlu0 %v2204, 127
        %v2213 = vpop.permute.xlu0 %2212
        %2214 = vrot.lane.b32.xlu0 %v2205, 127
        %v2215 = vpop.permute.xlu0 %2214
        %2216 = vrot.lane.b32.xlu0 %v2206, 127
        %v2217 = vpop.permute.xlu0 %2216
        %2218 = vrot.lane.b32.xlu0 %v2207, 127
        %v2219 = vpop.permute.xlu0 %2218
        %v2220 = vsel %vm395, %v2213, %v2215
        %v2221 = vsel %vm395, %v2215, %v2217
        %v2222 = vsel %vm395, %v2217, %v2219
        %v2226 = vadd.f32 %v2220, %v2221
        %v2227 = vadd.f32 %v2226, %v2222
        %2228 = vadd.xlane.f32.xlu0 %v2227
        %v2229 = vpop.xlane.xlu0 %2228
        %v2230 = vadd.f32 %v2195, %v2229
        %v2231 = vsub.f32 %v1606, %v2181
        %v2232 = vsub.f32 %v1607, %v2181
        %v2233 = vsub.f32 %v1608, %v2181
        %v2234 = vsub.f32 %v1609, %v2181
        %v2235 = vmul.f32 %v2231, %v2102
        %v2236 = vmul.f32 %v2232, %v2108
        %v2237 = vmul.f32 %v2233, %v2109
        %v2238 = vmul.f32 %v2234, %v2106
        %v2239 = vmul.f32 %v2235, %v2235
        %v2240 = vmul.f32 %v2236, %v2236
        %v2241 = vmul.f32 %v2237, %v2237
        %v2242 = vmul.f32 %v2238, %v2238
        %2247 = vrot.lane.b32.xlu0 %v2239, 110
        %v2248 = vpop.permute.xlu0 %2247
        %2249 = vrot.lane.b32.xlu0 %v2240, 110
        %v2250 = vpop.permute.xlu0 %2249
        %2251 = vrot.lane.b32.xlu0 %v2241, 110
        %v2252 = vpop.permute.xlu0 %2251
        %2253 = vrot.lane.b32.xlu0 %v2242, 110
        %v2254 = vpop.permute.xlu0 %2253
        %v2255 = vsel %vm539, %v2248, %v2250
        %v2256 = vsel %vm539, %v2250, %v2252
        %v2257 = vsel %vm539, %v2252, %v2254
        %v2261 = vadd.f32 %v2255, %v2256
        %v2262 = vadd.f32 %v2261, %v2257
        %2263 = vadd.xlane.f32.xlu0 %v2262
        %v2264 = vpop.xlane.xlu0 %2263
        %v2265 = vadd.f32 %v2230, %v2264
        %v2266 = vsub.f32 %v2033, %v2181
        %v2267 = vsub.f32 %v2034, %v2181
        %v2268 = vsub.f32 %v2035, %v2181
        %v2269 = vsub.f32 %v2036, %v2181
        %v2270 = vmul.f32 %v2266, %v2142
        %v2271 = vmul.f32 %v2267, %v2148
        %v2272 = vmul.f32 %v2268, %v2149
        %v2273 = vmul.f32 %v2269, %v2146
        %v2274 = vmul.f32 %v2270, %v2270
        %v2275 = vmul.f32 %v2271, %v2271
        %v2276 = vmul.f32 %v2272, %v2272
        %v2277 = vmul.f32 %v2273, %v2273
        %2282 = vrot.lane.b32.xlu0 %v2274, 109
        %v2283 = vpop.permute.xlu0 %2282
        %2284 = vrot.lane.b32.xlu0 %v2275, 109
        %v2285 = vpop.permute.xlu0 %2284
        %2286 = vrot.lane.b32.xlu0 %v2276, 109
        %v2287 = vpop.permute.xlu0 %2286
        %2288 = vrot.lane.b32.xlu0 %v2277, 109
        %v2289 = vpop.permute.xlu0 %2288
        %v2290 = vsel %vm656, %v2283, %v2285
        %v2291 = vsel %vm656, %v2285, %v2287
        %v2292 = vsel %vm656, %v2287, %v2289
        %v2296 = vadd.f32 %v2290, %v2291
        %v2297 = vadd.f32 %v2296, %v2292
        %2298 = vadd.xlane.f32.xlu0 %v2297
        %v2299 = vpop.xlane.xlu0 %2298
        %v2300 = vadd.f32 %v2265, %v2299
        %v2301 = vmul.f32 %v2300, 0.0009775171
        %s2302 = scalar_lea.vmem %s3, 24
        %v2303 = vld [vmem:[%s2302] sm:$0xff]
        %v2304 = vrot.slane %v2180, 4
        %v2305 = vadd.f32 %v2180, %v2304
        %v2306 = vrot.slane %v2305, 2
        %v2307 = vadd.f32 %v2305, %v2306
        %v2308 = vrot.slane %v2307, 1
        %v2309 = vadd.f32 %v2307, %v2308
        %v2310 = vmul.f32 %v2309, 0.00048828125
        %v2311 = vsub.f32 %v2181, %v2310
        %v2312 = vmul.f32 %v2311, %v2303
        %v2313 = vrot.slane %v2300, 4
        %v2314 = vadd.f32 %v2300, %v2313
        %v2315 = vrot.slane %v2314, 2
        %v2316 = vadd.f32 %v2314, %v2315
        %v2317 = vrot.slane %v2316, 1
        %v2318 = vadd.f32 %v2316, %v2317
        %v2319 = vmul.f32 %v2312, %v2312
        %v2320 = vsel %vm2067, %v2319, 0.0
        %v2321 = vrot.slane %v2320, 4
        %v2322 = vadd.f32 %v2320, %v2321
        %v2323 = vrot.slane %v2322, 2
        %v2324 = vadd.f32 %v2322, %v2323
        %v2325 = vrot.slane %v2324, 1
        %v2326 = vadd.f32 %v2324, %v2325
        %v2327 = vmul.f32 %v2326, 1024.0
        %v2328 = vadd.f32 %v2318, %v2327
        %v2329 = vmul.f32 %v2328, 0.0004885198
        %v2330 = vld [vmem:[%s3] sm:$0xff]
        %s2331 = scalar_lea.vmem %s3, 8
        %v2332 = vld [vmem:[%s2331] sm:$0xff]
        %s2333 = scalar_lea.vmem %s3, 16
        %v2334 = vld [vmem:[%s2333] sm:$0xff]
        %v2335 = vadd.f32 %v2301, 1e-05
        %v2336 = vrsqrt.pop %v2335
        %v2337 = vadd.f32 %v2329, 1e-05
        %v2338 = vrsqrt.pop %v2337
        %v2339 = vmul.f32 %v2330, %v2336
        %v2340 = vsub.f32 1.0, %v2330
        %v2341 = vmul.f32 %v2340, %v2338
        %v2342 = vadd.f32 %v2339, %v2341
        %v2343 = vmul.f32 %v2330, %v2181
        %v2344 = vmul.f32 %v2343, %v2336
        %v2345 = vmul.f32 %v2340, %v2310
        %v2346 = vmul.f32 %v2345, %v2338
        %v2347 = vadd.f32 %v2344, %v2346
        %v2348 = vsub.f32 0.0, %v2347
        %v2349 = vmul.f32 %v2332, %v2342
        %v2350 = vmul.f32 %v2332, %v2348
        %v2351 = vadd.f32 %v2350, %v2334
        %2353 = vset.pattern.permute.xlu0 0
        %2354 = vperm.xlu0 %2353, %v2349
        %v2355 = vpop.permute.xlu0 %2354
        %v2357 = vmul.f32 %v753, %v2355
        %v2358 = vmul.f32 %v754, %v2355
        %v2359 = vmul.f32 %v755, %v2355
        %2361 = vset.pattern.permute.xlu0 0
        %2362 = vperm.xlu0 %2361, %v2351
        %v2363 = vpop.permute.xlu0 %2362
        %v2365 = vadd.f32 %v2357, %v2363
        %v2366 = vadd.f32 %v2358, %v2363
        %v2367 = vadd.f32 %v2359, %v2363
        %v2368 = vmax.f32 %v2365, 0.0
        %v2369 = vmax.f32 %v2366, 0.0
        %v2370 = vmax.f32 %v2367, 0.0
        %2371 = vst [vmem:[%s205] sm:$0xff] %v2368
        %2372 = vst [vmem:[%s205 + $0x8] sm:$0xff] %v2369
        %2373 = vst [vmem:[%s205 + $0x10] sm:$0xff] %v2370
        %v2374 = vmul.f32 %v1179, %v2355
        %v2375 = vmul.f32 %v1180, %v2355
        %v2376 = vmul.f32 %v1181, %v2355
        %v2377 = vmul.f32 %v1182, %v2355
        %v2378 = vadd.f32 %v2374, %v2363
        %v2379 = vadd.f32 %v2375, %v2363
        %v2380 = vadd.f32 %v2376, %v2363
        %v2381 = vadd.f32 %v2377, %v2363
        %v2382 = vmax.f32 %v2378, 0.0
        %v2383 = vmax.f32 %v2379, 0.0
        %v2384 = vmax.f32 %v2380, 0.0
        %v2385 = vmax.f32 %v2381, 0.0
        %2390 = vrot.lane.b32.xlu0 %v2382, 127
        %v2391 = vpop.permute.xlu0 %2390
        %2392 = vrot.lane.b32.xlu0 %v2383, 127
        %v2393 = vpop.permute.xlu0 %2392
        %2394 = vrot.lane.b32.xlu0 %v2384, 127
        %v2395 = vpop.permute.xlu0 %2394
        %2396 = vrot.lane.b32.xlu0 %v2385, 127
        %v2397 = vpop.permute.xlu0 %2396
        %v2398 = vsel %vm395, %v2391, %v2393
        %v2399 = vsel %vm395, %v2393, %v2395
        %v2400 = vsel %vm395, %v2395, %v2397
        %s2404 = scalar_lea.vmem %s205, 24 [#allocation5]
        %2405 = vst [vmem:[%s2404] sm:$0xff] %v2398
        %2406 = vst [vmem:[%s2404 + $0x8] sm:$0xff] %v2399
        %2407 = vst [vmem:[%s2404 + $0x10] sm:$0xff] %v2400
        %v2408 = vmul.f32 %v1606, %v2355
        %v2409 = vmul.f32 %v1607, %v2355
        %v2410 = vmul.f32 %v1608, %v2355
        %v2411 = vmul.f32 %v1609, %v2355
        %v2412 = vadd.f32 %v2408, %v2363
        %v2413 = vadd.f32 %v2409, %v2363
        %v2414 = vadd.f32 %v2410, %v2363
        %v2415 = vadd.f32 %v2411, %v2363
        %v2416 = vmax.f32 %v2412, 0.0
        %v2417 = vmax.f32 %v2413, 0.0
        %v2418 = vmax.f32 %v2414, 0.0
        %v2419 = vmax.f32 %v2415, 0.0
        %2424 = vrot.lane.b32.xlu0 %v2416, 110
        %v2425 = vpop.permute.xlu0 %2424
        %2426 = vrot.lane.b32.xlu0 %v2417, 110
        %v2427 = vpop.permute.xlu0 %2426
        %2428 = vrot.lane.b32.xlu0 %v2418, 110
        %v2429 = vpop.permute.xlu0 %2428
        %2430 = vrot.lane.b32.xlu0 %v2419, 110
        %v2431 = vpop.permute.xlu0 %2430
        %v2432 = vsel %vm539, %v2425, %v2427
        %v2433 = vsel %vm539, %v2427, %v2429
        %v2434 = vsel %vm539, %v2429, %v2431
        %s2438 = scalar_lea.vmem %s205, 48 [#allocation5]
        %2439 = vst [vmem:[%s2438] sm:$0xff] %v2432
        %2440 = vst [vmem:[%s2438 + $0x8] sm:$0xff] %v2433
        %2441 = vst [vmem:[%s2438 + $0x10] sm:$0xff] %v2434
        %v2442 = vmul.f32 %v2033, %v2355
        %v2443 = vmul.f32 %v2034, %v2355
        %v2444 = vmul.f32 %v2035, %v2355
        %v2445 = vmul.f32 %v2036, %v2355
        %v2446 = vadd.f32 %v2442, %v2363
        %v2447 = vadd.f32 %v2443, %v2363
        %v2448 = vadd.f32 %v2444, %v2363
        %v2449 = vadd.f32 %v2445, %v2363
        %v2450 = vmax.f32 %v2446, 0.0
        %v2451 = vmax.f32 %v2447, 0.0
        %v2452 = vmax.f32 %v2448, 0.0
        %v2453 = vmax.f32 %v2449, 0.0
        %2458 = vrot.lane.b32.xlu0 %v2450, 109
        %v2459 = vpop.permute.xlu0 %2458
        %2460 = vrot.lane.b32.xlu0 %v2451, 109
        %v2461 = vpop.permute.xlu0 %2460
        %2462 = vrot.lane.b32.xlu0 %v2452, 109
        %v2463 = vpop.permute.xlu0 %2462
        %2464 = vrot.lane.b32.xlu0 %v2453, 109
        %v2465 = vpop.permute.xlu0 %2464
        %v2466 = vsel %vm656, %v2459, %v2461
        %v2467 = vsel %vm656, %v2461, %v2463
        %v2468 = vsel %vm656, %v2463, %v2465
        %s2472 = scalar_lea.vmem %s205, 72 [#allocation5]
        %2473 = vst [vmem:[%s2472] sm:$0xff] %v2466
        %2474 = vst [vmem:[%s2472 + $0x8] sm:$0xff] %v2467
        %2475 = vst [vmem:[%s2472 + $0x10] sm:$0xff] %v2468
        %s2476 = sand.u32 %s116, 1
        %s2477 = scalar_lea.sflag [#allocation4], %s2476
        %s2478 = sand.u32 %s116, 1
        %s2479 = smul.addr %s2478, 96
        %s2480 = scalar_lea.vmem [#allocation5], %s2479
        // Predicated region
        $region41: #{tpu_custom_call.1} parent=35 // pred_check
          %p2481 = pneg %p126
        $region42: #{tpu_custom_call.1} parent=35 // pred_check_branch
          %2483 = sbr.rel (%p2481) target = $region44
        $region43: #{tpu_custom_call.1} parent=35 // pred_region
          %s2485 = ssub.s32 1536, 1536
          %2486 = vsyncadd %s2477, %s2485
          %s2487 = smul.addr %s19, 12
          %s2488 = smul.addr %s2487, 128
          %s2489 = scalar_lea.hbm %s4, %s2488
          %s2490 = sshll.u32 %s2480, 4
          %s2491 = int_to_ptr.vmem [resolvable:$true] %s2490
          %2496 = dma.vmem_to_hbm [thread:$0]  %s2491, 1536, %s2489, %s2477, 384, 384, 24
        $region44: #{tpu_custom_call.1} parent=35 // pred_fallthru
          _
      $region36: #{tpu_custom_call.1} parent=5 // pred_fallthru
        _
      %p2497 = scmp.le.s32.totalorder 2, %s14
      // Predicated region
      $region45: #{tpu_custom_call.1} parent=5 // pred_check
        %p2498 = pneg %p2497
      $region46: #{tpu_custom_call.1} parent=5 // pred_check_branch
        %2500 = sbr.rel (%p2498) target = $region48
      $region47: #{tpu_custom_call.1} parent=5 // pred_region
        %s2501 = ssub.s32 %s14, 2
        // Predicated region
        $region49: #{tpu_custom_call.1} parent=47 // pred_check
          %p2502 = pneg %p132
        $region50: #{tpu_custom_call.1} parent=47 // pred_check_branch
          %2504 = sbr.rel (%p2502) target = $region52
        $region51: #{tpu_custom_call.1} parent=47 // pred_region
          %s2505 = sand.u32 %s117, 1
          %s2506 = scalar_lea.sflag [#allocation4], %s2505
          %s2507 = sand.u32 %s117, 1
          %s2508 = smul.addr %s2507, 96
          %s2509 = scalar_lea.vmem [#allocation5], %s2508
          %2510 = dma.done %s2506, 1536
        $region52: #{tpu_custom_call.1} parent=47 // pred_fallthru
          _
      $region48: #{tpu_custom_call.1} parent=5 // pred_fallthru
        _
    $region6: #{tpu_custom_call.1} parent=1 // loop_footer
      %s18 = sadd.s32 1, %s14
    $region7: #{tpu_custom_call.1} parent=1 // loop_footer_branch
      %13 = sbr.rel target = $region3
    $region8: #{tpu_custom_call.1} parent=1 // loop_exit
      _
    %2511 = vsyncpa [#allocation3], 1
    %s2512 = scalar_lea.sflag [#allocation3], 1
    %2513 = vsyncpa %s2512, 1
    %2514 = vsyncpa [#allocation4], 1
    %s2515 = scalar_lea.sflag [#allocation4], 1
    %2516 = vsyncpa %s2515, 1

</llo_original>
